<compile_context>
chip_gen: v7x
topology: tpu7x:2x2x1
jax: 0.10.0
libtpu: 0.0.40
codegen_flags: <defaults>
</compile_context>

<pallas_src>
import jax
import jax.numpy as jnp
from jax import lax
from jax.experimental import pallas as pl
from jax.experimental.pallas import tpu as pltpu

# ----- small, module-consistent sizes -----
B, T, OBS = 2, 8, 24        # batch, history length, raw history feature dim
HIST_FEAT = 10              # fc1 has hard-coded in_features=10 (= hist_obs[:, :, 14:])
S = 16                      # state_dims
A = 4                       # action_dims
F1 = 32                     # fc1_dims
H = 32                      # lstm_hidden_size  (4H = 128 -> one lane tile)
F2 = 32                     # fc2_dims
F3 = 32                     # fc3_dims
F4 = 32                     # fc4_dims

# ----- packed-weight row layout (all starts are multiples of 8 sublanes) -----
R_W1 = 0                    # (OBS, F1)        rows   0..23
R_WIH = R_W1 + OBS          # (F1, 4H)         rows  24..55   (g cols pre-scaled x2)
R_WHH = R_WIH + F1          # (H,  4H)         rows  56..87   (g cols pre-scaled x2)
R_W23H = R_WHH + H          # (H,  F2+F3)      rows  88..119  ([w2 | 0])
R_W23S = R_W23H + H         # (S,  F2+F3)      rows 120..135  ([0 | w3[:S]])
R_W23A = R_W23S + S         # (A,  F2+F3)      rows 136..139  ([0 | w3[S:]])
R_W4 = R_W23A + 8           # (F2+F3, F4)      rows 144..207  (pad A=4 rows to 8)
R_BIAS = R_W4 + F2 + F3     # bias block       rows 208..215
W_ROWS = R_BIAS + 8         # 216


def critic_kernel(state_ref, action_ref, hist_ref, hlen_ref, w_ref, q_ref):
    f32 = jnp.float32
    prec = lax.Precision.DEFAULT  # pin single-pass MXU matmuls

    def mm(a, b):
        return jnp.dot(a, b, preferred_element_type=f32, precision=prec)

    # ---- packed-weight views (one input DMA; static sublane-aligned slices) ----
    w1p = w_ref[R_W1:R_W1 + OBS, :F1]
    wih2 = w_ref[R_WIH:R_WIH + F1, :]
    whh2 = w_ref[R_WHH:R_WHH + H, :]
    w23h = w_ref[R_W23H:R_W23H + H, :F2 + F3]
    w23s = w_ref[R_W23S:R_W23S + S, :F2 + F3]
    w23a = w_ref[R_W23A:R_W23A + A, :F2 + F3]
    w4 = w_ref[R_W4:R_W4 + F2 + F3, :F4]
    bias = w_ref[R_BIAS:R_BIAS + 8, :]            # one aligned (8,128) load
    b1 = bias[0:1, :F1]
    bihh2 = bias[1:2, :]
    b23 = bias[2:3, :F2 + F3]
    b4 = bias[3:4, :F4]
    w5row = bias[4:5, :F4]
    b5 = bias[5:6, 0:1]

    # ---- hoisted, time-parallel matmuls (off the serial recurrence path) ----
    x_all = hist_ref[...]                                         # (B*T, OBS) batch-major
    a1 = jnp.maximum(mm(x_all, w1p) + b1, 0.0)                    # (B*T, F1)   relu(fc1)
    gx = mm(a1, wih2) + bihh2                                     # (B*T, 4H)   x@W_ih + (b_ih+b_hh)
    gx3 = gx.reshape(B, T, 4 * H)
    gx_t = [gx3[:, t, :] for t in range(T)]                       # per-step (B,4H), precomputed

    # precomputed gather masks (hoisted broadcast; overlaps the matmuls above)
    idx = hlen_ref[...] - 1                                       # (B,1): gather index = hist_length-1
    idxb = jnp.broadcast_to(idx, (B, H))
    masks = [idxb == t for t in range(T)]

    # fc3 ("current feature") head contribution; independent of the recurrence
    cur = mm(state_ref[...], w23s) + mm(action_ref[...], w23a) + b23   # (B, F2+F3)

    # ---- serial LSTM recurrence (T=8, Python-unrolled) ----
    # Per step: 1 MXU matmul + 1 full-width sigmoid + 1 tanh(c).  PyTorch gate
    # order is i, f, g, o; tanh(x) = 2*sigmoid(2x) - 1 with the x2 folded into
    # the g-gate weight columns.
    h = jnp.zeros((B, H), f32)
    c = jnp.zeros((B, H), f32)
    hsel = jnp.zeros((B, H), f32)
    for t in range(T):
        gates = gx_t[t] if t == 0 else gx_t[t] + mm(h, whh2)      # h0 == 0 -> skip matmul at t=0
        sig = jax.nn.sigmoid(gates)                               # one EUP pass over (B, 4H)
        i_g = sig[:, 0 * H:1 * H]
        f_g = sig[:, 1 * H:2 * H]
        g_g = 2.0 * sig[:, 2 * H:3 * H] - 1.0                     # == tanh(original g pre-act)
        o_g = sig[:, 3 * H:4 * H]
        c = f_g * c + i_g * g_g
        h = o_g * jnp.tanh(c)
        # emulate torch.gather(memory_out, 1, hist_length-1): keep h at
        # t == hist_length-1 (fc2 is per-timestep, so gathering before fc2 is
        # equivalent to gathering after it).
        hsel = jnp.where(masks[t], h, hsel)

    # ---- fused fc2/fc3 -> fc4 -> fc5 head ----
    # cat = [ relu(fc2(h_sel)) | relu(fc3([state|action])) ]  via block-column weights
    cat = jnp.maximum(mm(hsel, w23h) + cur, 0.0)                  # (B, F2+F3)
    out = jnp.maximum(mm(cat, w4) + b4, 0.0)                      # (B, F4)
    # fc5 as VPU multiply + lane reduction (skip an N=1 MXU round trip)
    q_ref[...] = jnp.sum(out * w5row, axis=-1, keepdims=True) + b5


def prepare_params(params):
    """One-time param fusion + packing into a single tile-aligned VMEM buffer."""
    f32 = jnp.float32
    # Fold the hist_observation[:, :, 14:] slice into a zero-padded fc1 weight.
    w1p = jnp.zeros((OBS, F1), f32).at[OBS - HIST_FEAT:].set(params["w1"])
    # tanh(x) = 2*sigmoid(2x) - 1: fold the factor 2 into the g-gate columns of
    # W_ih, W_hh and the (summed) bias.  Scaling by 2 is exact.
    gscale = jnp.concatenate(
        [jnp.ones((1, 2 * H), f32), jnp.full((1, H), 2.0, f32), jnp.ones((1, H), f32)], axis=1)
    wih2 = params["wih"] * gscale
    whh2 = params["whh"] * gscale
    bihh2 = (params["bih"] + params["bhh"]) * gscale
    # Block-column weights so cat = [relu(fc2(h)) | relu(fc3(sa))] needs no concatenate,
    # with fc3 split into state/action blocks (removes the wrapper-side concat).
    w23h = jnp.concatenate([params["w2"], jnp.zeros((H, F3), f32)], axis=1)       # (H,   F2+F3)
    w23s = jnp.concatenate([jnp.zeros((S, F2), f32), params["w3"][:S]], axis=1)   # (S,   F2+F3)
    w23a = jnp.concatenate([jnp.zeros((A, F2), f32), params["w3"][S:]], axis=1)   # (A,   F2+F3)
    b23 = jnp.concatenate([params["b2"], params["b3"]], axis=1)                   # (1,   F2+F3)
    w5row = params["w5"].reshape(1, F4)

    W = jnp.zeros((W_ROWS, 128), f32)
    W = W.at[R_W1:R_W1 + OBS, :F1].set(w1p)
    W = W.at[R_WIH:R_WIH + F1, :4 * H].set(wih2)
    W = W.at[R_WHH:R_WHH + H, :4 * H].set(whh2)
    W = W.at[R_W23H:R_W23H + H, :F2 + F3].set(w23h)
    W = W.at[R_W23S:R_W23S + S, :F2 + F3].set(w23s)
    W = W.at[R_W23A:R_W23A + A, :F2 + F3].set(w23a)
    W = W.at[R_W4:R_W4 + F2 + F3, :F4].set(params["w4"])
    W = W.at[R_BIAS + 0, :F1].set(params["b1"][0])
    W = W.at[R_BIAS + 1, :4 * H].set(bihh2[0])
    W = W.at[R_BIAS + 2, :F2 + F3].set(b23[0])
    W = W.at[R_BIAS + 3, :F4].set(params["b4"][0])
    W = W.at[R_BIAS + 4, :F4].set(w5row[0])
    W = W.at[R_BIAS + 5, 0].set(params["b5"][0, 0])
    return W


@jax.jit
def critic_forward(packed_w, state, action, hist_observation, hist_action, hist_length):
    del hist_action  # unused by the PyTorch forward as well
    # Only wrapper op: a contiguous (free) reshape; no pad/transpose/concat kernels.
    hist_flat = hist_observation.reshape(B * T, OBS)
    vmem = pl.BlockSpec(memory_space=pltpu.MemorySpace.VMEM)
    return pl.pallas_call(
        critic_kernel,
        out_shape=jax.ShapeDtypeStruct((B, 1), jnp.float32),
        in_specs=[vmem] * 5,
        out_specs=vmem,
    )(state, action, hist_flat, hist_length, packed_w)


def critic_reference(params, state, action, hist_observation, hist_length):
    """Pure-JAX reference mirroring the PyTorch forward (for verification)."""
    history = hist_observation[:, :, 14:]
    a1 = jax.nn.relu(history @ params["w1"] + params["b1"])          # (B, T, F1)

    def step(carry, x_t):
        h, c = carry
        gates = (x_t @ params["wih"] + params["bih"]
                 + h @ params["whh"] + params["bhh"])
        i = jax.nn.sigmoid(gates[:, :H]); f = jax.nn.sigmoid(gates[:, H:2 * H])
        g = jnp.tanh(gates[:, 2 * H:3 * H]); o = jax.nn.sigmoid(gates[:, 3 * H:])
        c = f * c + i * g
        h = o * jnp.tanh(c)
        return (h, c), h

    (_, _), hs = lax.scan(step, (jnp.zeros((B, H)), jnp.zeros((B, H))),
                          jnp.transpose(a1, (1, 0, 2)))
    hs = jnp.transpose(hs, (1, 0, 2))                                # (B, T, H)
    mem = jax.nn.relu(hs @ params["w2"] + params["b2"])              # (B, T, F2)
    mem = mem[jnp.arange(B), hist_length[:, 0] - 1]                  # gather -> (B, F2)
    cur = jax.nn.relu(jnp.concatenate([state, action], -1) @ params["w3"] + params["b3"])
    out = jax.nn.relu(jnp.concatenate([mem, cur], -1) @ params["w4"] + params["b4"])
    return out @ params["w5"] + params["b5"]                         # q: (B, 1)


def init_params(key):
    ks = jax.random.split(key, 16)
    n = lambda k, shape, scale=0.1: (scale * jax.random.normal(k, shape)).astype(jnp.float32)
    return {
        "w1": n(ks[0], (HIST_FEAT, F1)), "b1": n(ks[1], (1, F1)),
        # LSTM weights stacked [i | f | g | o] along the output axis, input-major
        "wih": n(ks[2], (F1, 4 * H)), "whh": n(ks[3], (H, 4 * H)),
        "bih": n(ks[4], (1, 4 * H)), "bhh": n(ks[5], (1, 4 * H)),
        "w2": n(ks[6], (H, F2)), "b2": n(ks[7], (1, F2)),
        "w3": n(ks[8], (S + A, F3)), "b3": n(ks[9], (1, F3)),
        "w4": n(ks[10], (F2 + F3, F4)), "b4": n(ks[11], (1, F4)),
        "w5": n(ks[12], (F4, 1)), "b5": n(ks[13], (1, 1)),
    }


if __name__ == "__main__":
    key = jax.random.PRNGKey(0)
    kp, k1, k2, k3, k4, k5 = jax.random.split(key, 6)
    params = init_params(kp)
    packed_w = prepare_params(params)

    state = jax.random.normal(k1, (B, S), dtype=jnp.float32)
    action = jax.random.normal(k2, (B, A), dtype=jnp.float32)
    hist_observation = jax.random.normal(k3, (B, T, OBS), dtype=jnp.float32)
    hist_action = jax.random.normal(k5, (B, T, A), dtype=jnp.float32)   # unused by forward
    # hist_length must lie in [1, T] (same assumption as the PyTorch gather).
    hist_length = jax.random.randint(k4, (B, 1), 1, T + 1, dtype=jnp.int32)

    q = critic_forward(packed_w, state, action, hist_observation, hist_action, hist_length)
    q = jax.block_until_ready(q)

    ref = critic_reference(params, state, action, hist_observation, hist_length)
    assert q.shape == (B, 1)
    assert jnp.allclose(q, ref, atol=2e-3, rtol=2e-3), (q, ref)

    print("KERNEL_OK")
</pallas_src>

<mosaic_0001>
module attributes {stable_mosaic.version = 11 : i64} {
  func.func @critic_kernel(%arg0: memref<2x16xf32, #tpu.memory_space<vmem>>, %arg1: memref<2x4xf32, #tpu.memory_space<vmem>>, %arg2: memref<16x24xf32, #tpu.memory_space<vmem>>, %arg3: memref<2x1xi32, #tpu.memory_space<vmem>>, %arg4: memref<216x128xf32, #tpu.memory_space<vmem>>, %arg5: memref<2x1xf32, #tpu.memory_space<vmem>>) attributes {dimension_semantics = [], scalar_prefetch = 0 : i64, scratch_operands = 0 : i64, tpu.core_type = #tpu.core_type<tc>} {
    %c0 = arith.constant 0 : index
    %c0_0 = arith.constant 0 : index
    %0 = vector.load %arg4[%c0, %c0_0] : memref<216x128xf32, #tpu.memory_space<vmem>>, vector<24x32xf32>
    %c24 = arith.constant 24 : index
    %c0_1 = arith.constant 0 : index
    %1 = vector.load %arg4[%c24, %c0_1] : memref<216x128xf32, #tpu.memory_space<vmem>>, vector<32x128xf32>
    %c56 = arith.constant 56 : index
    %c0_2 = arith.constant 0 : index
    %2 = vector.load %arg4[%c56, %c0_2] : memref<216x128xf32, #tpu.memory_space<vmem>>, vector<32x128xf32>
    %c88 = arith.constant 88 : index
    %c0_3 = arith.constant 0 : index
    %3 = vector.load %arg4[%c88, %c0_3] : memref<216x128xf32, #tpu.memory_space<vmem>>, vector<32x64xf32>
    %c120 = arith.constant 120 : index
    %c0_4 = arith.constant 0 : index
    %4 = vector.load %arg4[%c120, %c0_4] : memref<216x128xf32, #tpu.memory_space<vmem>>, vector<16x64xf32>
    %c136 = arith.constant 136 : index
    %c0_5 = arith.constant 0 : index
    %5 = vector.load %arg4[%c136, %c0_5] : memref<216x128xf32, #tpu.memory_space<vmem>>, vector<4x64xf32>
    %c144 = arith.constant 144 : index
    %c0_6 = arith.constant 0 : index
    %6 = vector.load %arg4[%c144, %c0_6] : memref<216x128xf32, #tpu.memory_space<vmem>>, vector<64x32xf32>
    %c208 = arith.constant 208 : index
    %c0_7 = arith.constant 0 : index
    %7 = vector.load %arg4[%c208, %c0_7] : memref<216x128xf32, #tpu.memory_space<vmem>>, vector<8x128xf32>
    %8 = vector.extract_strided_slice %7 {offsets = [0, 0], sizes = [1, 32], strides = [1, 1]} : vector<8x128xf32> to vector<1x32xf32>
    %9 = vector.extract_strided_slice %7 {offsets = [1, 0], sizes = [1, 128], strides = [1, 1]} : vector<8x128xf32> to vector<1x128xf32>
    %10 = vector.extract_strided_slice %7 {offsets = [2, 0], sizes = [1, 64], strides = [1, 1]} : vector<8x128xf32> to vector<1x64xf32>
    %11 = vector.extract_strided_slice %7 {offsets = [3, 0], sizes = [1, 32], strides = [1, 1]} : vector<8x128xf32> to vector<1x32xf32>
    %12 = vector.extract_strided_slice %7 {offsets = [4, 0], sizes = [1, 32], strides = [1, 1]} : vector<8x128xf32> to vector<1x32xf32>
    %13 = vector.extract_strided_slice %7 {offsets = [5, 0], sizes = [1, 1], strides = [1, 1]} : vector<8x128xf32> to vector<1x1xf32>
    %c0_8 = arith.constant 0 : index
    %c0_9 = arith.constant 0 : index
    %14 = vector.load %arg2[%c0_8, %c0_9] : memref<16x24xf32, #tpu.memory_space<vmem>>, vector<16x24xf32>
    %cst = arith.constant dense<0.000000e+00> : vector<16x32xf32>
    %15 = tpu.matmul %14, %0, %cst {dimension_numbers = #tpu.dot_dimension_numbers<[1], [0], [0], [1], [0, 0, 1, 1], [], []>} : vector<16x24xf32>, vector<24x32xf32>, vector<16x32xf32> -> vector<16x32xf32>
    %16 = vector.broadcast %8 : vector<1x32xf32> to vector<16x32xf32>
    %17 = arith.addf %15, %16 : vector<16x32xf32>
    %cst_10 = arith.constant 0.000000e+00 : f32
    %18 = vector.broadcast %cst_10 : f32 to vector<16x32xf32>
    %19 = arith.maximumf %17, %18 : vector<16x32xf32>
    %cst_11 = arith.constant dense<0.000000e+00> : vector<16x128xf32>
    %20 = tpu.matmul %19, %1, %cst_11 {dimension_numbers = #tpu.dot_dimension_numbers<[1], [0], [0], [1], [0, 0, 1, 1], [], []>} : vector<16x32xf32>, vector<32x128xf32>, vector<16x128xf32> -> vector<16x128xf32>
    %21 = vector.broadcast %9 : vector<1x128xf32> to vector<16x128xf32>
    %22 = arith.addf %20, %21 : vector<16x128xf32>
    %23 = vector.shape_cast %22 : vector<16x128xf32> to vector<2x8x128xf32>
    %24 = vector.extract_strided_slice %23 {offsets = [0, 0, 0], sizes = [2, 1, 128], strides = [1, 1, 1]} : vector<2x8x128xf32> to vector<2x1x128xf32>
    %25 = vector.shape_cast %24 : vector<2x1x128xf32> to vector<2x128xf32>
    %26 = vector.extract_strided_slice %23 {offsets = [0, 1, 0], sizes = [2, 1, 128], strides = [1, 1, 1]} : vector<2x8x128xf32> to vector<2x1x128xf32>
    %27 = vector.shape_cast %26 : vector<2x1x128xf32> to vector<2x128xf32>
    %28 = vector.extract_strided_slice %23 {offsets = [0, 2, 0], sizes = [2, 1, 128], strides = [1, 1, 1]} : vector<2x8x128xf32> to vector<2x1x128xf32>
    %29 = vector.shape_cast %28 : vector<2x1x128xf32> to vector<2x128xf32>
    %30 = vector.extract_strided_slice %23 {offsets = [0, 3, 0], sizes = [2, 1, 128], strides = [1, 1, 1]} : vector<2x8x128xf32> to vector<2x1x128xf32>
    %31 = vector.shape_cast %30 : vector<2x1x128xf32> to vector<2x128xf32>
    %32 = vector.extract_strided_slice %23 {offsets = [0, 4, 0], sizes = [2, 1, 128], strides = [1, 1, 1]} : vector<2x8x128xf32> to vector<2x1x128xf32>
    %33 = vector.shape_cast %32 : vector<2x1x128xf32> to vector<2x128xf32>
    %34 = vector.extract_strided_slice %23 {offsets = [0, 5, 0], sizes = [2, 1, 128], strides = [1, 1, 1]} : vector<2x8x128xf32> to vector<2x1x128xf32>
    %35 = vector.shape_cast %34 : vector<2x1x128xf32> to vector<2x128xf32>
    %36 = vector.extract_strided_slice %23 {offsets = [0, 6, 0], sizes = [2, 1, 128], strides = [1, 1, 1]} : vector<2x8x128xf32> to vector<2x1x128xf32>
    %37 = vector.shape_cast %36 : vector<2x1x128xf32> to vector<2x128xf32>
    %38 = vector.extract_strided_slice %23 {offsets = [0, 7, 0], sizes = [2, 1, 128], strides = [1, 1, 1]} : vector<2x8x128xf32> to vector<2x1x128xf32>
    %39 = vector.shape_cast %38 : vector<2x1x128xf32> to vector<2x128xf32>
    %c0_12 = arith.constant 0 : index
    %c0_13 = arith.constant 0 : index
    %40 = vector.load %arg3[%c0_12, %c0_13] : memref<2x1xi32, #tpu.memory_space<vmem>>, vector<2x1xi32>
    %c1_i32 = arith.constant 1 : i32
    %41 = vector.broadcast %c1_i32 : i32 to vector<2x1xi32>
    %42 = arith.subi %40, %41 : vector<2x1xi32>
    %43 = vector.shape_cast %42 : vector<2x1xi32> to vector<2x1xi32>
    %44 = vector.broadcast %43 : vector<2x1xi32> to vector<2x32xi32>
    %c0_i32 = arith.constant 0 : i32
    %45 = vector.broadcast %c0_i32 : i32 to vector<2x32xi32>
    %46 = arith.cmpi eq, %44, %45 : vector<2x32xi32>
    %c1_i32_14 = arith.constant 1 : i32
    %47 = vector.broadcast %c1_i32_14 : i32 to vector<2x32xi32>
    %48 = arith.cmpi eq, %44, %47 : vector<2x32xi32>
    %c2_i32 = arith.constant 2 : i32
    %49 = vector.broadcast %c2_i32 : i32 to vector<2x32xi32>
    %50 = arith.cmpi eq, %44, %49 : vector<2x32xi32>
    %c3_i32 = arith.constant 3 : i32
    %51 = vector.broadcast %c3_i32 : i32 to vector<2x32xi32>
    %52 = arith.cmpi eq, %44, %51 : vector<2x32xi32>
    %c4_i32 = arith.constant 4 : i32
    %53 = vector.broadcast %c4_i32 : i32 to vector<2x32xi32>
    %54 = arith.cmpi eq, %44, %53 : vector<2x32xi32>
    %c5_i32 = arith.constant 5 : i32
    %55 = vector.broadcast %c5_i32 : i32 to vector<2x32xi32>
    %56 = arith.cmpi eq, %44, %55 : vector<2x32xi32>
    %c6_i32 = arith.constant 6 : i32
    %57 = vector.broadcast %c6_i32 : i32 to vector<2x32xi32>
    %58 = arith.cmpi eq, %44, %57 : vector<2x32xi32>
    %c7_i32 = arith.constant 7 : i32
    %59 = vector.broadcast %c7_i32 : i32 to vector<2x32xi32>
    %60 = arith.cmpi eq, %44, %59 : vector<2x32xi32>
    %c0_15 = arith.constant 0 : index
    %c0_16 = arith.constant 0 : index
    %61 = vector.load %arg0[%c0_15, %c0_16] : memref<2x16xf32, #tpu.memory_space<vmem>>, vector<2x16xf32>
    %cst_17 = arith.constant dense<0.000000e+00> : vector<2x64xf32>
    %62 = tpu.matmul %61, %4, %cst_17 {dimension_numbers = #tpu.dot_dimension_numbers<[1], [0], [0], [1], [0, 0, 1, 1], [], []>} : vector<2x16xf32>, vector<16x64xf32>, vector<2x64xf32> -> vector<2x64xf32>
    %c0_18 = arith.constant 0 : index
    %c0_19 = arith.constant 0 : index
    %63 = vector.load %arg1[%c0_18, %c0_19] : memref<2x4xf32, #tpu.memory_space<vmem>>, vector<2x4xf32>
    %cst_20 = arith.constant dense<0.000000e+00> : vector<2x64xf32>
    %64 = tpu.matmul %63, %5, %cst_20 {dimension_numbers = #tpu.dot_dimension_numbers<[1], [0], [0], [1], [0, 0, 1, 1], [], []>} : vector<2x4xf32>, vector<4x64xf32>, vector<2x64xf32> -> vector<2x64xf32>
    %65 = arith.addf %62, %64 : vector<2x64xf32>
    %66 = vector.broadcast %10 : vector<1x64xf32> to vector<2x64xf32>
    %67 = arith.addf %65, %66 : vector<2x64xf32>
    %cst_21 = arith.constant 0.000000e+00 : f32
    %68 = vector.broadcast %cst_21 : f32 to vector<2x32xf32>
    %cst_22 = arith.constant 0.000000e+00 : f32
    %69 = vector.broadcast %cst_22 : f32 to vector<2x32xf32>
    %70 = arith.negf %25 : vector<2x128xf32>
    %71 = math.exp %70 : vector<2x128xf32>
    %cst_23 = arith.constant 1.000000e+00 : f32
    %72 = vector.broadcast %cst_23 : f32 to vector<2x128xf32>
    %73 = arith.addf %72, %71 : vector<2x128xf32>
    %74 = arith.divf %72, %73 : vector<2x128xf32>
    %75 = vector.extract_strided_slice %74 {offsets = [0, 0], sizes = [2, 32], strides = [1, 1]} : vector<2x128xf32> to vector<2x32xf32>
    %76 = vector.extract_strided_slice %74 {offsets = [0, 32], sizes = [2, 32], strides = [1, 1]} : vector<2x128xf32> to vector<2x32xf32>
    %77 = vector.extract_strided_slice %74 {offsets = [0, 64], sizes = [2, 32], strides = [1, 1]} : vector<2x128xf32> to vector<2x32xf32>
    %cst_24 = arith.constant 2.000000e+00 : f32
    %78 = vector.broadcast %cst_24 : f32 to vector<2x32xf32>
    %79 = arith.mulf %78, %77 : vector<2x32xf32>
    %cst_25 = arith.constant 1.000000e+00 : f32
    %80 = vector.broadcast %cst_25 : f32 to vector<2x32xf32>
    %81 = arith.subf %79, %80 : vector<2x32xf32>
    %82 = vector.extract_strided_slice %74 {offsets = [0, 96], sizes = [2, 32], strides = [1, 1]} : vector<2x128xf32> to vector<2x32xf32>
    %83 = arith.mulf %76, %68 : vector<2x32xf32>
    %84 = arith.mulf %75, %81 : vector<2x32xf32>
    %85 = arith.addf %83, %84 : vector<2x32xf32>
    %86 = math.tanh %85 : vector<2x32xf32>
    %87 = arith.mulf %82, %86 : vector<2x32xf32>
    %88 = arith.select %46, %87, %69 : vector<2x32xi1>, vector<2x32xf32>
    %cst_26 = arith.constant dense<0.000000e+00> : vector<2x128xf32>
    %89 = tpu.matmul %87, %2, %cst_26 {dimension_numbers = #tpu.dot_dimension_numbers<[1], [0], [0], [1], [0, 0, 1, 1], [], []>} : vector<2x32xf32>, vector<32x128xf32>, vector<2x128xf32> -> vector<2x128xf32>
    %90 = arith.addf %27, %89 : vector<2x128xf32>
    %91 = arith.negf %90 : vector<2x128xf32>
    %92 = math.exp %91 : vector<2x128xf32>
    %cst_27 = arith.constant 1.000000e+00 : f32
    %93 = vector.broadcast %cst_27 : f32 to vector<2x128xf32>
    %94 = arith.addf %93, %92 : vector<2x128xf32>
    %95 = arith.divf %93, %94 : vector<2x128xf32>
    %96 = vector.extract_strided_slice %95 {offsets = [0, 0], sizes = [2, 32], strides = [1, 1]} : vector<2x128xf32> to vector<2x32xf32>
    %97 = vector.extract_strided_slice %95 {offsets = [0, 32], sizes = [2, 32], strides = [1, 1]} : vector<2x128xf32> to vector<2x32xf32>
    %98 = vector.extract_strided_slice %95 {offsets = [0, 64], sizes = [2, 32], strides = [1, 1]} : vector<2x128xf32> to vector<2x32xf32>
    %cst_28 = arith.constant 2.000000e+00 : f32
    %99 = vector.broadcast %cst_28 : f32 to vector<2x32xf32>
    %100 = arith.mulf %99, %98 : vector<2x32xf32>
    %cst_29 = arith.constant 1.000000e+00 : f32
    %101 = vector.broadcast %cst_29 : f32 to vector<2x32xf32>
    %102 = arith.subf %100, %101 : vector<2x32xf32>
    %103 = vector.extract_strided_slice %95 {offsets = [0, 96], sizes = [2, 32], strides = [1, 1]} : vector<2x128xf32> to vector<2x32xf32>
    %104 = arith.mulf %97, %85 : vector<2x32xf32>
    %105 = arith.mulf %96, %102 : vector<2x32xf32>
    %106 = arith.addf %104, %105 : vector<2x32xf32>
    %107 = math.tanh %106 : vector<2x32xf32>
    %108 = arith.mulf %103, %107 : vector<2x32xf32>
    %109 = arith.select %48, %108, %88 : vector<2x32xi1>, vector<2x32xf32>
    %cst_30 = arith.constant dense<0.000000e+00> : vector<2x128xf32>
    %110 = tpu.matmul %108, %2, %cst_30 {dimension_numbers = #tpu.dot_dimension_numbers<[1], [0], [0], [1], [0, 0, 1, 1], [], []>} : vector<2x32xf32>, vector<32x128xf32>, vector<2x128xf32> -> vector<2x128xf32>
    %111 = arith.addf %29, %110 : vector<2x128xf32>
    %112 = arith.negf %111 : vector<2x128xf32>
    %113 = math.exp %112 : vector<2x128xf32>
    %cst_31 = arith.constant 1.000000e+00 : f32
    %114 = vector.broadcast %cst_31 : f32 to vector<2x128xf32>
    %115 = arith.addf %114, %113 : vector<2x128xf32>
    %116 = arith.divf %114, %115 : vector<2x128xf32>
    %117 = vector.extract_strided_slice %116 {offsets = [0, 0], sizes = [2, 32], strides = [1, 1]} : vector<2x128xf32> to vector<2x32xf32>
    %118 = vector.extract_strided_slice %116 {offsets = [0, 32], sizes = [2, 32], strides = [1, 1]} : vector<2x128xf32> to vector<2x32xf32>
    %119 = vector.extract_strided_slice %116 {offsets = [0, 64], sizes = [2, 32], strides = [1, 1]} : vector<2x128xf32> to vector<2x32xf32>
    %cst_32 = arith.constant 2.000000e+00 : f32
    %120 = vector.broadcast %cst_32 : f32 to vector<2x32xf32>
    %121 = arith.mulf %120, %119 : vector<2x32xf32>
    %cst_33 = arith.constant 1.000000e+00 : f32
    %122 = vector.broadcast %cst_33 : f32 to vector<2x32xf32>
    %123 = arith.subf %121, %122 : vector<2x32xf32>
    %124 = vector.extract_strided_slice %116 {offsets = [0, 96], sizes = [2, 32], strides = [1, 1]} : vector<2x128xf32> to vector<2x32xf32>
    %125 = arith.mulf %118, %106 : vector<2x32xf32>
    %126 = arith.mulf %117, %123 : vector<2x32xf32>
    %127 = arith.addf %125, %126 : vector<2x32xf32>
    %128 = math.tanh %127 : vector<2x32xf32>
    %129 = arith.mulf %124, %128 : vector<2x32xf32>
    %130 = arith.select %50, %129, %109 : vector<2x32xi1>, vector<2x32xf32>
    %cst_34 = arith.constant dense<0.000000e+00> : vector<2x128xf32>
    %131 = tpu.matmul %129, %2, %cst_34 {dimension_numbers = #tpu.dot_dimension_numbers<[1], [0], [0], [1], [0, 0, 1, 1], [], []>} : vector<2x32xf32>, vector<32x128xf32>, vector<2x128xf32> -> vector<2x128xf32>
    %132 = arith.addf %31, %131 : vector<2x128xf32>
    %133 = arith.negf %132 : vector<2x128xf32>
    %134 = math.exp %133 : vector<2x128xf32>
    %cst_35 = arith.constant 1.000000e+00 : f32
    %135 = vector.broadcast %cst_35 : f32 to vector<2x128xf32>
    %136 = arith.addf %135, %134 : vector<2x128xf32>
    %137 = arith.divf %135, %136 : vector<2x128xf32>
    %138 = vector.extract_strided_slice %137 {offsets = [0, 0], sizes = [2, 32], strides = [1, 1]} : vector<2x128xf32> to vector<2x32xf32>
    %139 = vector.extract_strided_slice %137 {offsets = [0, 32], sizes = [2, 32], strides = [1, 1]} : vector<2x128xf32> to vector<2x32xf32>
    %140 = vector.extract_strided_slice %137 {offsets = [0, 64], sizes = [2, 32], strides = [1, 1]} : vector<2x128xf32> to vector<2x32xf32>
    %cst_36 = arith.constant 2.000000e+00 : f32
    %141 = vector.broadcast %cst_36 : f32 to vector<2x32xf32>
    %142 = arith.mulf %141, %140 : vector<2x32xf32>
    %cst_37 = arith.constant 1.000000e+00 : f32
    %143 = vector.broadcast %cst_37 : f32 to vector<2x32xf32>
    %144 = arith.subf %142, %143 : vector<2x32xf32>
    %145 = vector.extract_strided_slice %137 {offsets = [0, 96], sizes = [2, 32], strides = [1, 1]} : vector<2x128xf32> to vector<2x32xf32>
    %146 = arith.mulf %139, %127 : vector<2x32xf32>
    %147 = arith.mulf %138, %144 : vector<2x32xf32>
    %148 = arith.addf %146, %147 : vector<2x32xf32>
    %149 = math.tanh %148 : vector<2x32xf32>
    %150 = arith.mulf %145, %149 : vector<2x32xf32>
    %151 = arith.select %52, %150, %130 : vector<2x32xi1>, vector<2x32xf32>
    %cst_38 = arith.constant dense<0.000000e+00> : vector<2x128xf32>
    %152 = tpu.matmul %150, %2, %cst_38 {dimension_numbers = #tpu.dot_dimension_numbers<[1], [0], [0], [1], [0, 0, 1, 1], [], []>} : vector<2x32xf32>, vector<32x128xf32>, vector<2x128xf32> -> vector<2x128xf32>
    %153 = arith.addf %33, %152 : vector<2x128xf32>
    %154 = arith.negf %153 : vector<2x128xf32>
    %155 = math.exp %154 : vector<2x128xf32>
    %cst_39 = arith.constant 1.000000e+00 : f32
    %156 = vector.broadcast %cst_39 : f32 to vector<2x128xf32>
    %157 = arith.addf %156, %155 : vector<2x128xf32>
    %158 = arith.divf %156, %157 : vector<2x128xf32>
    %159 = vector.extract_strided_slice %158 {offsets = [0, 0], sizes = [2, 32], strides = [1, 1]} : vector<2x128xf32> to vector<2x32xf32>
    %160 = vector.extract_strided_slice %158 {offsets = [0, 32], sizes = [2, 32], strides = [1, 1]} : vector<2x128xf32> to vector<2x32xf32>
    %161 = vector.extract_strided_slice %158 {offsets = [0, 64], sizes = [2, 32], strides = [1, 1]} : vector<2x128xf32> to vector<2x32xf32>
    %cst_40 = arith.constant 2.000000e+00 : f32
    %162 = vector.broadcast %cst_40 : f32 to vector<2x32xf32>
    %163 = arith.mulf %162, %161 : vector<2x32xf32>
    %cst_41 = arith.constant 1.000000e+00 : f32
    %164 = vector.broadcast %cst_41 : f32 to vector<2x32xf32>
    %165 = arith.subf %163, %164 : vector<2x32xf32>
    %166 = vector.extract_strided_slice %158 {offsets = [0, 96], sizes = [2, 32], strides = [1, 1]} : vector<2x128xf32> to vector<2x32xf32>
    %167 = arith.mulf %160, %148 : vector<2x32xf32>
    %168 = arith.mulf %159, %165 : vector<2x32xf32>
    %169 = arith.addf %167, %168 : vector<2x32xf32>
    %170 = math.tanh %169 : vector<2x32xf32>
    %171 = arith.mulf %166, %170 : vector<2x32xf32>
    %172 = arith.select %54, %171, %151 : vector<2x32xi1>, vector<2x32xf32>
    %cst_42 = arith.constant dense<0.000000e+00> : vector<2x128xf32>
    %173 = tpu.matmul %171, %2, %cst_42 {dimension_numbers = #tpu.dot_dimension_numbers<[1], [0], [0], [1], [0, 0, 1, 1], [], []>} : vector<2x32xf32>, vector<32x128xf32>, vector<2x128xf32> -> vector<2x128xf32>
    %174 = arith.addf %35, %173 : vector<2x128xf32>
    %175 = arith.negf %174 : vector<2x128xf32>
    %176 = math.exp %175 : vector<2x128xf32>
    %cst_43 = arith.constant 1.000000e+00 : f32
    %177 = vector.broadcast %cst_43 : f32 to vector<2x128xf32>
    %178 = arith.addf %177, %176 : vector<2x128xf32>
    %179 = arith.divf %177, %178 : vector<2x128xf32>
    %180 = vector.extract_strided_slice %179 {offsets = [0, 0], sizes = [2, 32], strides = [1, 1]} : vector<2x128xf32> to vector<2x32xf32>
    %181 = vector.extract_strided_slice %179 {offsets = [0, 32], sizes = [2, 32], strides = [1, 1]} : vector<2x128xf32> to vector<2x32xf32>
    %182 = vector.extract_strided_slice %179 {offsets = [0, 64], sizes = [2, 32], strides = [1, 1]} : vector<2x128xf32> to vector<2x32xf32>
    %cst_44 = arith.constant 2.000000e+00 : f32
    %183 = vector.broadcast %cst_44 : f32 to vector<2x32xf32>
    %184 = arith.mulf %183, %182 : vector<2x32xf32>
    %cst_45 = arith.constant 1.000000e+00 : f32
    %185 = vector.broadcast %cst_45 : f32 to vector<2x32xf32>
    %186 = arith.subf %184, %185 : vector<2x32xf32>
    %187 = vector.extract_strided_slice %179 {offsets = [0, 96], sizes = [2, 32], strides = [1, 1]} : vector<2x128xf32> to vector<2x32xf32>
    %188 = arith.mulf %181, %169 : vector<2x32xf32>
    %189 = arith.mulf %180, %186 : vector<2x32xf32>
    %190 = arith.addf %188, %189 : vector<2x32xf32>
    %191 = math.tanh %190 : vector<2x32xf32>
    %192 = arith.mulf %187, %191 : vector<2x32xf32>
    %193 = arith.select %56, %192, %172 : vector<2x32xi1>, vector<2x32xf32>
    %cst_46 = arith.constant dense<0.000000e+00> : vector<2x128xf32>
    %194 = tpu.matmul %192, %2, %cst_46 {dimension_numbers = #tpu.dot_dimension_numbers<[1], [0], [0], [1], [0, 0, 1, 1], [], []>} : vector<2x32xf32>, vector<32x128xf32>, vector<2x128xf32> -> vector<2x128xf32>
    %195 = arith.addf %37, %194 : vector<2x128xf32>
    %196 = arith.negf %195 : vector<2x128xf32>
    %197 = math.exp %196 : vector<2x128xf32>
    %cst_47 = arith.constant 1.000000e+00 : f32
    %198 = vector.broadcast %cst_47 : f32 to vector<2x128xf32>
    %199 = arith.addf %198, %197 : vector<2x128xf32>
    %200 = arith.divf %198, %199 : vector<2x128xf32>
    %201 = vector.extract_strided_slice %200 {offsets = [0, 0], sizes = [2, 32], strides = [1, 1]} : vector<2x128xf32> to vector<2x32xf32>
    %202 = vector.extract_strided_slice %200 {offsets = [0, 32], sizes = [2, 32], strides = [1, 1]} : vector<2x128xf32> to vector<2x32xf32>
    %203 = vector.extract_strided_slice %200 {offsets = [0, 64], sizes = [2, 32], strides = [1, 1]} : vector<2x128xf32> to vector<2x32xf32>
    %cst_48 = arith.constant 2.000000e+00 : f32
    %204 = vector.broadcast %cst_48 : f32 to vector<2x32xf32>
    %205 = arith.mulf %204, %203 : vector<2x32xf32>
    %cst_49 = arith.constant 1.000000e+00 : f32
    %206 = vector.broadcast %cst_49 : f32 to vector<2x32xf32>
    %207 = arith.subf %205, %206 : vector<2x32xf32>
    %208 = vector.extract_strided_slice %200 {offsets = [0, 96], sizes = [2, 32], strides = [1, 1]} : vector<2x128xf32> to vector<2x32xf32>
    %209 = arith.mulf %202, %190 : vector<2x32xf32>
    %210 = arith.mulf %201, %207 : vector<2x32xf32>
    %211 = arith.addf %209, %210 : vector<2x32xf32>
    %212 = math.tanh %211 : vector<2x32xf32>
    %213 = arith.mulf %208, %212 : vector<2x32xf32>
    %214 = arith.select %58, %213, %193 : vector<2x32xi1>, vector<2x32xf32>
    %cst_50 = arith.constant dense<0.000000e+00> : vector<2x128xf32>
    %215 = tpu.matmul %213, %2, %cst_50 {dimension_numbers = #tpu.dot_dimension_numbers<[1], [0], [0], [1], [0, 0, 1, 1], [], []>} : vector<2x32xf32>, vector<32x128xf32>, vector<2x128xf32> -> vector<2x128xf32>
    %216 = arith.addf %39, %215 : vector<2x128xf32>
    %217 = arith.negf %216 : vector<2x128xf32>
    %218 = math.exp %217 : vector<2x128xf32>
    %cst_51 = arith.constant 1.000000e+00 : f32
    %219 = vector.broadcast %cst_51 : f32 to vector<2x128xf32>
    %220 = arith.addf %219, %218 : vector<2x128xf32>
    %221 = arith.divf %219, %220 : vector<2x128xf32>
    %222 = vector.extract_strided_slice %221 {offsets = [0, 0], sizes = [2, 32], strides = [1, 1]} : vector<2x128xf32> to vector<2x32xf32>
    %223 = vector.extract_strided_slice %221 {offsets = [0, 32], sizes = [2, 32], strides = [1, 1]} : vector<2x128xf32> to vector<2x32xf32>
    %224 = vector.extract_strided_slice %221 {offsets = [0, 64], sizes = [2, 32], strides = [1, 1]} : vector<2x128xf32> to vector<2x32xf32>
    %cst_52 = arith.constant 2.000000e+00 : f32
    %225 = vector.broadcast %cst_52 : f32 to vector<2x32xf32>
    %226 = arith.mulf %225, %224 : vector<2x32xf32>
    %cst_53 = arith.constant 1.000000e+00 : f32
    %227 = vector.broadcast %cst_53 : f32 to vector<2x32xf32>
    %228 = arith.subf %226, %227 : vector<2x32xf32>
    %229 = vector.extract_strided_slice %221 {offsets = [0, 96], sizes = [2, 32], strides = [1, 1]} : vector<2x128xf32> to vector<2x32xf32>
    %230 = arith.mulf %223, %211 : vector<2x32xf32>
    %231 = arith.mulf %222, %228 : vector<2x32xf32>
    %232 = arith.addf %230, %231 : vector<2x32xf32>
    %233 = math.tanh %232 : vector<2x32xf32>
    %234 = arith.mulf %229, %233 : vector<2x32xf32>
    %235 = arith.select %60, %234, %214 : vector<2x32xi1>, vector<2x32xf32>
    %cst_54 = arith.constant dense<0.000000e+00> : vector<2x64xf32>
    %236 = tpu.matmul %235, %3, %cst_54 {dimension_numbers = #tpu.dot_dimension_numbers<[1], [0], [0], [1], [0, 0, 1, 1], [], []>} : vector<2x32xf32>, vector<32x64xf32>, vector<2x64xf32> -> vector<2x64xf32>
    %237 = arith.addf %236, %67 : vector<2x64xf32>
    %cst_55 = arith.constant 0.000000e+00 : f32
    %238 = vector.broadcast %cst_55 : f32 to vector<2x64xf32>
    %239 = arith.maximumf %237, %238 : vector<2x64xf32>
    %cst_56 = arith.constant dense<0.000000e+00> : vector<2x32xf32>
    %240 = tpu.matmul %239, %6, %cst_56 {dimension_numbers = #tpu.dot_dimension_numbers<[1], [0], [0], [1], [0, 0, 1, 1], [], []>} : vector<2x64xf32>, vector<64x32xf32>, vector<2x32xf32> -> vector<2x32xf32>
    %241 = vector.broadcast %11 : vector<1x32xf32> to vector<2x32xf32>
    %242 = arith.addf %240, %241 : vector<2x32xf32>
    %cst_57 = arith.constant 0.000000e+00 : f32
    %243 = vector.broadcast %cst_57 : f32 to vector<2x32xf32>
    %244 = arith.maximumf %242, %243 : vector<2x32xf32>
    %245 = vector.broadcast %12 : vector<1x32xf32> to vector<2x32xf32>
    %246 = arith.mulf %244, %245 : vector<2x32xf32>
    %cst_58 = arith.constant dense<0.000000e+00> : vector<2xf32>
    %247 = vector.multi_reduction <add>, %246, %cst_58 [1] : vector<2x32xf32> to vector<2xf32>
    %248 = vector.shape_cast %247 : vector<2xf32> to vector<2x1xf32>
    %249 = vector.broadcast %13 : vector<1x1xf32> to vector<2x1xf32>
    %250 = arith.addf %248, %249 : vector<2x1xf32>
    %c0_59 = arith.constant 0 : index
    %c0_60 = arith.constant 0 : index
    %251 = vector.load %arg5[%c0_59, %c0_60] : memref<2x1xf32, #tpu.memory_space<vmem>>, vector<2x1xf32>
    tpu.vector_store %arg5[%c0_59, %c0_60], %250 {strides = array<i32>} : memref<2x1xf32, #tpu.memory_space<vmem>>, vector<2x1xf32>,
    return
  }
}

</mosaic_0001>

<llo_original>
// kernel: critic_forward.1
$region0: #{critic_forward.1}
  #allocation0 [shape = 'u32[]', space=smem, size = 0x4, offset = 0x4, fixed_abs, tag = 'smem constant byte address 0x4 - core index']
  #allocation1 [shape = 'u32[144,128]{1,0:T(1,128)}', space=vmem, size = 0x12000, scoped, tag = 'internal scratch']
  %s0 = inlined_call_operand.vmem [shape: f32[2,16], index: 0, kind: input, shape index: {}]
  %s1 = inlined_call_operand.hbm [shape: f32[2,4], index: 1, kind: input, shape index: {}]
  %s2 = inlined_call_operand.vmem [shape: f32[16,24], index: 2, kind: input, shape index: {}]
  %s3 = inlined_call_operand.vmem [shape: s32[2,1], index: 3, kind: input, shape index: {}]
  %s4 = inlined_call_operand.hbm [shape: f32[216,128], index: 4, kind: input, shape index: {}]
  %s5 = inlined_call_operand.vmem [shape: f32[2,1], index: 5, kind: output, shape index: {}]
  %s6 = sld [smem:[#allocation0]]
  $region38: #{critic_forward.1} parent=0
    _
  %s8 = ssub.s32 1, %s6
  %s9 = scalar_select 0, %s8, %s6
  $region1: #{critic_forward.1} parent=0
    #allocation2 [shape = 'u8[1024]{0}', space=vmem, size = 0x400, scoped, tag = 'input window, operand 1, single buffered']
    #allocation3 [shape = 's32[1]{0}', space=sflag, size = 0x4, scoped, tag = 'scoped memory for critic_forward.1']
    #allocation4 [shape = 'u8[110592]{0}', space=vmem, size = 0x1b000, scoped, tag = 'input window, operand 4, single buffered']
    #allocation5 [shape = 's32[1]{0}', space=sflag, size = 0x4, scoped, tag = 'scoped memory for critic_forward.1']
    %10 = vsyncpa [#allocation3], 0
    %11 = vsyncpa [#allocation5], 0
    // Predicated region
    $region2: #{critic_forward.1} parent=1 // pred_check
      _
    $region3: #{critic_forward.1} parent=1 // pred_check_branch
      %13 = sbr.rel (0) target = $region5
    $region4: #{critic_forward.1} parent=1 // pred_region
      _
    $region5: #{critic_forward.1} parent=1 // pred_fallthru
      _
    // Predicated region
    $region6: #{critic_forward.1} parent=1 // pred_check
      _
    $region7: #{critic_forward.1} parent=1 // pred_check_branch
      %15 = sbr.rel (0) target = $region9
    $region8: #{critic_forward.1} parent=1 // pred_region
      %s17 = ssub.s32 32, 32
      %18 = vsyncadd [#allocation3], %s17
      %s20 = sshll.u32 [#allocation2], 4
      %s21 = int_to_ptr.vmem [resolvable:$true] %s20
      %23 = dma.hbm_to_vmem [thread:$0]  %s1, 32, %s21, [#allocation3]
    $region9: #{critic_forward.1} parent=1 // pred_fallthru
      _
    // Predicated region
    $region10: #{critic_forward.1} parent=1 // pred_check
      _
    $region11: #{critic_forward.1} parent=1 // pred_check_branch
      %25 = sbr.rel (0) target = $region13
    $region12: #{critic_forward.1} parent=1 // pred_region
      _
    $region13: #{critic_forward.1} parent=1 // pred_fallthru
      _
    // Predicated region
    $region14: #{critic_forward.1} parent=1 // pred_check
      _
    $region15: #{critic_forward.1} parent=1 // pred_check_branch
      %27 = sbr.rel (0) target = $region17
    $region16: #{critic_forward.1} parent=1 // pred_region
      _
    $region17: #{critic_forward.1} parent=1 // pred_fallthru
      _
    // Predicated region
    $region18: #{critic_forward.1} parent=1 // pred_check
      _
    $region19: #{critic_forward.1} parent=1 // pred_check_branch
      %29 = sbr.rel (0) target = $region21
    $region20: #{critic_forward.1} parent=1 // pred_region
      %s31 = ssub.s32 3456, 3456
      %32 = vsyncadd [#allocation5], %s31
      %s33 = sshll.u32 [#allocation4], 4
      %s34 = int_to_ptr.vmem [resolvable:$true] %s33
      %39 = dma.hbm_to_vmem [thread:$0]  %s4, 3456, %s34, [#allocation5], 128, 128, 8
    $region21: #{critic_forward.1} parent=1 // pred_fallthru
      _
    // Predicated region
    $region22: #{critic_forward.1} parent=1 // pred_check
      _
    $region23: #{critic_forward.1} parent=1 // pred_check_branch
      %41 = sbr.rel (0) target = $region25
    $region24: #{critic_forward.1} parent=1 // pred_region
      %42 = dma.done [#allocation3], 32
    $region25: #{critic_forward.1} parent=1 // pred_fallthru
      _
    // Predicated region
    $region26: #{critic_forward.1} parent=1 // pred_check
      _
    $region27: #{critic_forward.1} parent=1 // pred_check_branch
      %44 = sbr.rel (0) target = $region29
    $region28: #{critic_forward.1} parent=1 // pred_region
      %45 = dma.done [#allocation5], 3456
    $region29: #{critic_forward.1} parent=1 // pred_fallthru
      _
    %v46 = vld [vmem:[#allocation4] sm:$0xff]
    %v47 = vld [vmem:[#allocation4 + $0x8] sm:$0xff]
    %v48 = vld [vmem:[#allocation4 + $0x10] sm:$0xff]
    %v49 = vld [vmem:[#allocation4 + $0x18] sm:$0xff]
    %v50 = vld [vmem:[#allocation4 + $0x20] sm:$0xff]
    %v51 = vld [vmem:[#allocation4 + $0x28] sm:$0xff]
    %v52 = vld [vmem:[#allocation4 + $0x30] sm:$0xff]
    %v53 = vld [vmem:[#allocation4 + $0x38] sm:$0xff]
    %v54 = vld [vmem:[#allocation4 + $0x40] sm:$0xff]
    %v55 = vld [vmem:[#allocation4 + $0x48] sm:$0xff]
    %v56 = vld [vmem:[#allocation4 + $0x50] sm:$0xff]
    %v57 = vld [vmem:[#allocation4 + $0x58] sm:$0xff]
    %v58 = vld [vmem:[#allocation4 + $0x60] sm:$0xff]
    %v59 = vld [vmem:[#allocation4 + $0x68] sm:$0xff]
    %v60 = vld [vmem:[#allocation4 + $0x70] sm:$0xff]
    %v61 = vld [vmem:[#allocation4 + $0x78] sm:$0xff]
    %v62 = vld [vmem:[#allocation4 + $0x80] sm:$0xff]
    %v63 = vld [vmem:[#allocation4 + $0x88] sm:$0xf]
    %v64 = vld [vmem:[#allocation4 + $0x90] sm:$0xff]
    %v65 = vld [vmem:[#allocation4 + $0x98] sm:$0xff]
    %v66 = vld [vmem:[#allocation4 + $0xa0] sm:$0xff]
    %v67 = vld [vmem:[#allocation4 + $0xa8] sm:$0xff]
    %v68 = vld [vmem:[#allocation4 + $0xb0] sm:$0xff]
    %v69 = vld [vmem:[#allocation4 + $0xb8] sm:$0xff]
    %v70 = vld [vmem:[#allocation4 + $0xc0] sm:$0xff]
    %v71 = vld [vmem:[#allocation4 + $0xc8] sm:$0xff]
    %v72 = vld [vmem:[#allocation4 + $0xd0] sm:$0xff]
    %v73 = vld [vmem:[%s2] sm:$0xff]
    %v74 = vld [vmem:[%s2 + $0x8] sm:$0xff]
    %v75 = vlaneseq
    %v76 = vshrl.u32 %v75, 7
    %v77 = vsub.s32 0, %v76
    %v78 = vrot.slane %v72, %v77
    %vm79 = vcmask 195584
    %v81 = vsel %vm79, %v73, 0
    %v84 = vsel %vm79, %v74, 0
    %86 = vmatprep.subr.mxu0 0.0
    %87 = vmatpush1.msra.mxu0 %v46
    %88 = vmatprep.subr.mxu0 0.0
    %89 = vmatpush1.msra.mxu0 %v47
    %90 = vmatprep.subr.mxu0 0.0
    %91 = vmatpush1.msra.mxu0 %v48
    %92 = vmatprep.subr.mxu0 0.0
    %93 = vmatpush1.msra.mxu0 0.0
    %94 = vmatprep.subr.mxu0 0.0
    %95 = vmatpush1.msra.mxu0 0.0
    %96 = vmatprep.subr.mxu0 0.0
    %97 = vmatpush1.msra.mxu0 0.0
    %98 = vmatprep.subr.mxu0 0.0
    %99 = vmatpush1.msra.mxu0 0.0
    %100 = vmatprep.subr.mxu0 0.0
    %101 = vmatpush1.msra.mxu0 0.0
    %102 = vmatprep.subr.mxu0 0.0
    %103 = vmatpush1.msra.mxu0 0.0
    %104 = vmatprep.subr.mxu0 0.0
    %105 = vmatpush1.msra.mxu0 0.0
    %106 = vmatprep.subr.mxu0 0.0
    %107 = vmatpush1.msra.mxu0 0.0
    %108 = vmatprep.subr.mxu0 0.0
    %109 = vmatpush1.msra.mxu0 0.0
    %110 = vmatprep.subr.mxu0 0.0
    %111 = vmatpush1.msra.mxu0 0.0
    %112 = vmatprep.subr.mxu0 0.0
    %113 = vmatpush1.msra.mxu0 0.0
    %114 = vmatprep.subr.mxu0 0.0
    %115 = vmatpush1.msra.mxu0 0.0
    %116 = vmatprep.subr.mxu0 0.0
    %117 = vmatpush1.msra.mxu0 0.0
    %118 = vmatprep.subr.mxu0 0.0
    %119 = vmatpush1.msra.mxu0 0.0
    %120 = vmatprep.subr.mxu0 0.0
    %121 = vmatpush1.msra.mxu0 0.0
    %122 = vmatprep.subr.mxu0 0.0
    %123 = vmatpush1.msra.mxu0 0.0
    %124 = vmatprep.subr.mxu0 0.0
    %125 = vmatpush1.msra.mxu0 0.0
    %126 = vmatprep.subr.mxu0 0.0
    %127 = vmatpush1.msra.mxu0 0.0
    %128 = vmatprep.subr.mxu0 0.0
    %129 = vmatpush1.msra.mxu0 0.0
    %130 = vmatprep.subr.mxu0 0.0
    %131 = vmatpush1.msra.mxu0 0.0
    %132 = vmatprep.subr.mxu0 0.0
    %133 = vmatpush1.msra.mxu0 0.0
    %134 = vmatprep.subr.mxu0 0.0
    %135 = vmatpush1.msra.mxu0 0.0
    %136 = vmatprep.subr.mxu0 0.0
    %137 = vmatpush1.msra.mxu0 0.0
    %138 = vmatprep.subr.mxu0 0.0
    %139 = vmatpush1.msra.mxu0 0.0
    %140 = vmatprep.subr.mxu0 0.0
    %141 = vmatpush1.msra.mxu0 0.0
    %142 = vmatprep.subr.mxu0 0.0
    %143 = vmatpush1.msra.mxu0 0.0
    %144 = vmatprep.subr.mxu0 0.0
    %145 = vmatpush1.msra.mxu0 0.0
    %146 = vmatprep.subr.mxu0 0.0
    %147 = vmatpush1.msra.mxu0 0.0
    %148 = vmatprep.subr.mxu0 0.0
    %149 = vmatpush1.msra.mxu0 0.0
    %150 = vmatprep.mubr.f32.mxu0 0.0
    %151 = vmatmul.mubr.f32.gmra.mrb[0].mxu0 %v81
    %v152 = vpop.f32.mrb[0].mxu0
    %v153 = vadd.f32 %v78, %v152
    %v154 = vpop.f32.mrb[0].mxu0
    %155 = vmatprep.mubr.f32.mxu0 0.0
    %156 = vmatmul.mubr.f32.gmra.mrb[0].mxu0 %v84
    %v157 = vpop.f32.mrb[0].mxu0
    %v158 = vadd.f32 %v78, %v157
    %v159 = vpop.f32.mrb[0].mxu0
    %160 = vdwg.mxu0
    %v161 = vmax.f32 %v153, 0.0
    %v162 = vmax.f32 %v158, 0.0
    %v163 = vlaneseq
    %v164 = vshrl.u32 %v163, 7
    %v165 = vsub.s32 1, %v164
    %v166 = vrot.slane %v72, %v165
    %vm167 = vcmask 261120
    %v169 = vsel %vm167, %v161, 0
    %v172 = vsel %vm167, %v162, 0
    %174 = vmatprep.subr.mxu0 0.0
    %175 = vmatpush1.msra.mxu0 %v49
    %176 = vmatprep.subr.mxu0 0.0
    %177 = vmatpush1.msra.mxu0 %v50
    %178 = vmatprep.subr.mxu0 0.0
    %179 = vmatpush1.msra.mxu0 %v51
    %180 = vmatprep.subr.mxu0 0.0
    %181 = vmatpush1.msra.mxu0 %v52
    %182 = vmatprep.subr.mxu0 0.0
    %183 = vmatpush1.msra.mxu0 0.0
    %184 = vmatprep.subr.mxu0 0.0
    %185 = vmatpush1.msra.mxu0 0.0
    %186 = vmatprep.subr.mxu0 0.0
    %187 = vmatpush1.msra.mxu0 0.0
    %188 = vmatprep.subr.mxu0 0.0
    %189 = vmatpush1.msra.mxu0 0.0
    %190 = vmatprep.subr.mxu0 0.0
    %191 = vmatpush1.msra.mxu0 0.0
    %192 = vmatprep.subr.mxu0 0.0
    %193 = vmatpush1.msra.mxu0 0.0
    %194 = vmatprep.subr.mxu0 0.0
    %195 = vmatpush1.msra.mxu0 0.0
    %196 = vmatprep.subr.mxu0 0.0
    %197 = vmatpush1.msra.mxu0 0.0
    %198 = vmatprep.subr.mxu0 0.0
    %199 = vmatpush1.msra.mxu0 0.0
    %200 = vmatprep.subr.mxu0 0.0
    %201 = vmatpush1.msra.mxu0 0.0
    %202 = vmatprep.subr.mxu0 0.0
    %203 = vmatpush1.msra.mxu0 0.0
    %204 = vmatprep.subr.mxu0 0.0
    %205 = vmatpush1.msra.mxu0 0.0
    %206 = vmatprep.subr.mxu0 0.0
    %207 = vmatpush1.msra.mxu0 0.0
    %208 = vmatprep.subr.mxu0 0.0
    %209 = vmatpush1.msra.mxu0 0.0
    %210 = vmatprep.subr.mxu0 0.0
    %211 = vmatpush1.msra.mxu0 0.0
    %212 = vmatprep.subr.mxu0 0.0
    %213 = vmatpush1.msra.mxu0 0.0
    %214 = vmatprep.subr.mxu0 0.0
    %215 = vmatpush1.msra.mxu0 0.0
    %216 = vmatprep.subr.mxu0 0.0
    %217 = vmatpush1.msra.mxu0 0.0
    %218 = vmatprep.subr.mxu0 0.0
    %219 = vmatpush1.msra.mxu0 0.0
    %220 = vmatprep.subr.mxu0 0.0
    %221 = vmatpush1.msra.mxu0 0.0
    %222 = vmatprep.subr.mxu0 0.0
    %223 = vmatpush1.msra.mxu0 0.0
    %224 = vmatprep.subr.mxu0 0.0
    %225 = vmatpush1.msra.mxu0 0.0
    %226 = vmatprep.subr.mxu0 0.0
    %227 = vmatpush1.msra.mxu0 0.0
    %228 = vmatprep.subr.mxu0 0.0
    %229 = vmatpush1.msra.mxu0 0.0
    %230 = vmatprep.subr.mxu0 0.0
    %231 = vmatpush1.msra.mxu0 0.0
    %232 = vmatprep.subr.mxu0 0.0
    %233 = vmatpush1.msra.mxu0 0.0
    %234 = vmatprep.subr.mxu0 0.0
    %235 = vmatpush1.msra.mxu0 0.0
    %236 = vmatprep.subr.mxu0 0.0
    %237 = vmatpush1.msra.mxu0 0.0
    %238 = vmatprep.mubr.f32.mxu0 0.0
    %239 = vmatmul.mubr.f32.gmra.mrb[0].mxu0 %v169
    %v240 = vpop.f32.mrb[0].mxu0
    %v241 = vadd.f32 %v166, %v240
    %v242 = vpop.f32.mrb[0].mxu0
    %243 = vmatprep.mubr.f32.mxu0 0.0
    %244 = vmatmul.mubr.f32.gmra.mrb[0].mxu0 %v172
    %v245 = vpop.f32.mrb[0].mxu0
    %v246 = vadd.f32 %v166, %v245
    %v247 = vpop.f32.mrb[0].mxu0
    %248 = vdwg.mxu0
    %v249 = vld [vmem:[%s3] sm:$0x3]
    %v250 = vsub.s32 %v249, 1
    %251 = vset.pattern.permute.xlu0 0
    %252 = vperm.xlu0 %251, %v250
    %v253 = vpop.permute.xlu0 %252
    %vm254 = vcmp.eq.s32.totalorder %v253, 0
    %vm255 = vcmp.eq.s32.totalorder %v253, 1
    %vm256 = vcmp.eq.s32.totalorder %v253, 2
    %vm257 = vcmp.eq.s32.totalorder %v253, 3
    %vm258 = vcmp.eq.s32.totalorder %v253, 4
    %vm259 = vcmp.eq.s32.totalorder %v253, 5
    %vm260 = vcmp.eq.s32.totalorder %v253, 6
    %vm261 = vcmp.eq.s32.totalorder %v253, 7
    %v262 = vld [vmem:[%s0] sm:$0x3]
    %v263 = vld [vmem:[#allocation2] sm:$0x3]
    %vm264 = vcmask 31744
    %v266 = vsel %vm264, %v263, 0
    %vm268 = vcmask 1043456
    %v270 = vsel %vm268, %v63, 0
    %272 = vmatprep.subr.mxu0 0.0
    %273 = vmatpush1.msra.mxu0 %v270
    %274 = vmatprep.subr.mxu0 0.0
    %275 = vmatpush1.msra.mxu0 0.0
    %276 = vmatprep.subr.mxu0 0.0
    %277 = vmatpush1.msra.mxu0 0.0
    %278 = vmatprep.subr.mxu0 0.0
    %279 = vmatpush1.msra.mxu0 0.0
    %280 = vmatprep.subr.mxu0 0.0
    %281 = vmatpush1.msra.mxu0 0.0
    %282 = vmatprep.subr.mxu0 0.0
    %283 = vmatpush1.msra.mxu0 0.0
    %284 = vmatprep.subr.mxu0 0.0
    %285 = vmatpush1.msra.mxu0 0.0
    %286 = vmatprep.subr.mxu0 0.0
    %287 = vmatpush1.msra.mxu0 0.0
    %288 = vmatprep.subr.mxu0 0.0
    %289 = vmatpush1.msra.mxu0 0.0
    %290 = vmatprep.subr.mxu0 0.0
    %291 = vmatpush1.msra.mxu0 0.0
    %292 = vmatprep.subr.mxu0 0.0
    %293 = vmatpush1.msra.mxu0 0.0
    %294 = vmatprep.subr.mxu0 0.0
    %295 = vmatpush1.msra.mxu0 0.0
    %296 = vmatprep.subr.mxu0 0.0
    %297 = vmatpush1.msra.mxu0 0.0
    %298 = vmatprep.subr.mxu0 0.0
    %299 = vmatpush1.msra.mxu0 0.0
    %300 = vmatprep.subr.mxu0 0.0
    %301 = vmatpush1.msra.mxu0 0.0
    %302 = vmatprep.subr.mxu0 0.0
    %303 = vmatpush1.msra.mxu0 0.0
    %304 = vmatprep.subr.mxu0 0.0
    %305 = vmatpush1.msra.mxu0 0.0
    %306 = vmatprep.subr.mxu0 0.0
    %307 = vmatpush1.msra.mxu0 0.0
    %308 = vmatprep.subr.mxu0 0.0
    %309 = vmatpush1.msra.mxu0 0.0
    %310 = vmatprep.subr.mxu0 0.0
    %311 = vmatpush1.msra.mxu0 0.0
    %312 = vmatprep.subr.mxu0 0.0
    %313 = vmatpush1.msra.mxu0 0.0
    %314 = vmatprep.subr.mxu0 0.0
    %315 = vmatpush1.msra.mxu0 0.0
    %316 = vmatprep.subr.mxu0 0.0
    %317 = vmatpush1.msra.mxu0 0.0
    %318 = vmatprep.subr.mxu0 0.0
    %319 = vmatpush1.msra.mxu0 0.0
    %320 = vmatprep.subr.mxu0 0.0
    %321 = vmatpush1.msra.mxu0 0.0
    %322 = vmatprep.subr.mxu0 0.0
    %323 = vmatpush1.msra.mxu0 0.0
    %324 = vmatprep.subr.mxu0 0.0
    %325 = vmatpush1.msra.mxu0 0.0
    %326 = vmatprep.subr.mxu0 0.0
    %327 = vmatpush1.msra.mxu0 0.0
    %328 = vmatprep.subr.mxu0 0.0
    %329 = vmatpush1.msra.mxu0 0.0
    %330 = vmatprep.subr.mxu0 0.0
    %331 = vmatpush1.msra.mxu0 0.0
    %332 = vmatprep.subr.mxu0 0.0
    %333 = vmatpush1.msra.mxu0 0.0
    %334 = vmatprep.subr.mxu0 0.0
    %335 = vmatpush1.msra.mxu0 0.0
    %336 = vmatprep.mubr.f32.mxu0 0.0
    %337 = vmatmul.mubr.f32.gmra.mrb[0].mxu0 %v266
    %v338 = vpop.f32.mrb[0].mxu0
    %v339 = vadd.f32 0.0, %v338
    %v340 = vpop.f32.mrb[0].mxu0
    %341 = vdwg.mxu0
    %vm342 = vcmask 130048
    %v344 = vsel %vm342, %v262, 0
    %346 = vmatprep.subr.mxu0 0.0
    %347 = vmatpush1.msra.mxu0 %v61
    %348 = vmatprep.subr.mxu0 0.0
    %349 = vmatpush1.msra.mxu0 %v62
    %350 = vmatprep.subr.mxu0 0.0
    %351 = vmatpush1.msra.mxu0 0.0
    %352 = vmatprep.subr.mxu0 0.0
    %353 = vmatpush1.msra.mxu0 0.0
    %354 = vmatprep.subr.mxu0 0.0
    %355 = vmatpush1.msra.mxu0 0.0
    %356 = vmatprep.subr.mxu0 0.0
    %357 = vmatpush1.msra.mxu0 0.0
    %358 = vmatprep.subr.mxu0 0.0
    %359 = vmatpush1.msra.mxu0 0.0
    %360 = vmatprep.subr.mxu0 0.0
    %361 = vmatpush1.msra.mxu0 0.0
    %362 = vmatprep.subr.mxu0 0.0
    %363 = vmatpush1.msra.mxu0 0.0
    %364 = vmatprep.subr.mxu0 0.0
    %365 = vmatpush1.msra.mxu0 0.0
    %366 = vmatprep.subr.mxu0 0.0
    %367 = vmatpush1.msra.mxu0 0.0
    %368 = vmatprep.subr.mxu0 0.0
    %369 = vmatpush1.msra.mxu0 0.0
    %370 = vmatprep.subr.mxu0 0.0
    %371 = vmatpush1.msra.mxu0 0.0
    %372 = vmatprep.subr.mxu0 0.0
    %373 = vmatpush1.msra.mxu0 0.0
    %374 = vmatprep.subr.mxu0 0.0
    %375 = vmatpush1.msra.mxu0 0.0
    %376 = vmatprep.subr.mxu0 0.0
    %377 = vmatpush1.msra.mxu0 0.0
    %378 = vmatprep.subr.mxu0 0.0
    %379 = vmatpush1.msra.mxu0 0.0
    %380 = vmatprep.subr.mxu0 0.0
    %381 = vmatpush1.msra.mxu0 0.0
    %382 = vmatprep.subr.mxu0 0.0
    %383 = vmatpush1.msra.mxu0 0.0
    %384 = vmatprep.subr.mxu0 0.0
    %385 = vmatpush1.msra.mxu0 0.0
    %386 = vmatprep.subr.mxu0 0.0
    %387 = vmatpush1.msra.mxu0 0.0
    %388 = vmatprep.subr.mxu0 0.0
    %389 = vmatpush1.msra.mxu0 0.0
    %390 = vmatprep.subr.mxu0 0.0
    %391 = vmatpush1.msra.mxu0 0.0
    %392 = vmatprep.subr.mxu0 0.0
    %393 = vmatpush1.msra.mxu0 0.0
    %394 = vmatprep.subr.mxu0 0.0
    %395 = vmatpush1.msra.mxu0 0.0
    %396 = vmatprep.subr.mxu0 0.0
    %397 = vmatpush1.msra.mxu0 0.0
    %398 = vmatprep.subr.mxu0 0.0
    %399 = vmatpush1.msra.mxu0 0.0
    %400 = vmatprep.subr.mxu0 0.0
    %401 = vmatpush1.msra.mxu0 0.0
    %402 = vmatprep.subr.mxu0 0.0
    %403 = vmatpush1.msra.mxu0 0.0
    %404 = vmatprep.subr.mxu0 0.0
    %405 = vmatpush1.msra.mxu0 0.0
    %406 = vmatprep.subr.mxu0 0.0
    %407 = vmatpush1.msra.mxu0 0.0
    %408 = vmatprep.subr.mxu0 0.0
    %409 = vmatpush1.msra.mxu0 0.0
    %410 = vmatprep.mubr.f32.mxu0 0.0
    %411 = vmatmul.mubr.f32.gmra.mrb[0].mxu0 %v344
    %v412 = vpop.f32.mrb[0].mxu0
    %v413 = vadd.f32 %v339, %v412
    %v414 = vpop.f32.mrb[0].mxu0
    %415 = vdwg.mxu0
    %v416 = vlaneseq
    %v417 = vshrl.u32 %v416, 7
    %v418 = vsub.s32 2, %v417
    %v419 = vrot.slane %v72, %v418
    %v420 = vadd.f32 %v413, %v419
    %v421 = vxor.u32 %v241, 2147483648
    %v422 = vxor.u32 %v246, 2147483648
    %v423 = vmul.f32 %v421, 1.442695
    %v424 = vpow.pop %v423
    %v425 = vmul.f32 %v422, 1.442695
    %v426 = vpow.pop %v425
    %v427 = vadd.f32 %v424, 1.0
    %v428 = vadd.f32 %v426, 1.0
    %v429 = vrcp.pop %v427
    %v430 = vmul.f32 1.0, %v429
    %v431 = vrcp.pop %v428
    %v432 = vmul.f32 1.0, %v431
    %v433 = vmul.f32 %v430, 2.0
    %v434 = vmul.f32 %v432, 2.0
    %v435 = vsub.f32 %v433, 1.0
    %v436 = vsub.f32 %v434, 1.0
    %v437 = vmul.f32 %v430, 0.0
    %v438 = vmul.f32 %v432, 0.0
    %441 = vrot.lane.b32.xlu0 %v435, 64
    %v442 = vpop.permute.xlu0 %441
    %443 = vrot.lane.b32.xlu0 %v436, 64
    %v444 = vpop.permute.xlu0 %443
    %v447 = vmul.f32 %v430, %v442
    %v448 = vmul.f32 %v432, %v444
    %451 = vrot.lane.b32.xlu0 %v447, 32
    %v452 = vpop.permute.xlu0 %451
    %453 = vrot.lane.b32.xlu0 %v448, 32
    %v454 = vpop.permute.xlu0 %453
    %v457 = vadd.f32 %v437, %v452
    %v458 = vadd.f32 %v438, %v454
    %v459 = vtanh.pop %v457
    %v460 = vtanh.pop %v458
    %463 = vrot.lane.b32.xlu0 %v459, 64
    %v464 = vpop.permute.xlu0 %463
    %465 = vrot.lane.b32.xlu0 %v460, 64
    %v466 = vpop.permute.xlu0 %465
    %v469 = vmul.f32 %v430, %v464
    %v470 = vmul.f32 %v432, %v466
    %v473 = vrot.slane %v470, 7
    %vm474 = vcmask 1041409
    %v475 = vsel %vm474, %v473, %v469
    %476 = vrot.lane.b32.xlu0 %v475, 32
    %v477 = vpop.permute.xlu0 %476
    %v479 = vsel %vm254, %v477, 0.0
    %v480 = vsel %vm167, %v477, 0
    %482 = vmatprep.subr.mxu0 0.0
    %483 = vmatpush1.msra.mxu0 %v53
    %484 = vmatprep.subr.mxu0 0.0
    %485 = vmatpush1.msra.mxu0 %v54
    %486 = vmatprep.subr.mxu0 0.0
    %487 = vmatpush1.msra.mxu0 %v55
    %488 = vmatprep.subr.mxu0 0.0
    %489 = vmatpush1.msra.mxu0 %v56
    %490 = vmatprep.subr.mxu0 0.0
    %491 = vmatpush1.msra.mxu0 0.0
    %492 = vmatprep.subr.mxu0 0.0
    %493 = vmatpush1.msra.mxu0 0.0
    %494 = vmatprep.subr.mxu0 0.0
    %495 = vmatpush1.msra.mxu0 0.0
    %496 = vmatprep.subr.mxu0 0.0
    %497 = vmatpush1.msra.mxu0 0.0
    %498 = vmatprep.subr.mxu0 0.0
    %499 = vmatpush1.msra.mxu0 0.0
    %500 = vmatprep.subr.mxu0 0.0
    %501 = vmatpush1.msra.mxu0 0.0
    %502 = vmatprep.subr.mxu0 0.0
    %503 = vmatpush1.msra.mxu0 0.0
    %504 = vmatprep.subr.mxu0 0.0
    %505 = vmatpush1.msra.mxu0 0.0
    %506 = vmatprep.subr.mxu0 0.0
    %507 = vmatpush1.msra.mxu0 0.0
    %508 = vmatprep.subr.mxu0 0.0
    %509 = vmatpush1.msra.mxu0 0.0
    %510 = vmatprep.subr.mxu0 0.0
    %511 = vmatpush1.msra.mxu0 0.0
    %512 = vmatprep.subr.mxu0 0.0
    %513 = vmatpush1.msra.mxu0 0.0
    %514 = vmatprep.subr.mxu0 0.0
    %515 = vmatpush1.msra.mxu0 0.0
    %516 = vmatprep.subr.mxu0 0.0
    %517 = vmatpush1.msra.mxu0 0.0
    %518 = vmatprep.subr.mxu0 0.0
    %519 = vmatpush1.msra.mxu0 0.0
    %520 = vmatprep.subr.mxu0 0.0
    %521 = vmatpush1.msra.mxu0 0.0
    %522 = vmatprep.subr.mxu0 0.0
    %523 = vmatpush1.msra.mxu0 0.0
    %524 = vmatprep.subr.mxu0 0.0
    %525 = vmatpush1.msra.mxu0 0.0
    %526 = vmatprep.subr.mxu0 0.0
    %527 = vmatpush1.msra.mxu0 0.0
    %528 = vmatprep.subr.mxu0 0.0
    %529 = vmatpush1.msra.mxu0 0.0
    %530 = vmatprep.subr.mxu0 0.0
    %531 = vmatpush1.msra.mxu0 0.0
    %532 = vmatprep.subr.mxu0 0.0
    %533 = vmatpush1.msra.mxu0 0.0
    %534 = vmatprep.subr.mxu0 0.0
    %535 = vmatpush1.msra.mxu0 0.0
    %536 = vmatprep.subr.mxu0 0.0
    %537 = vmatpush1.msra.mxu0 0.0
    %538 = vmatprep.subr.mxu0 0.0
    %539 = vmatpush1.msra.mxu0 0.0
    %540 = vmatprep.subr.mxu0 0.0
    %541 = vmatpush1.msra.mxu0 0.0
    %542 = vmatprep.subr.mxu0 0.0
    %543 = vmatpush1.msra.mxu0 0.0
    %544 = vmatprep.subr.mxu0 0.0
    %545 = vmatpush1.msra.mxu0 0.0
    %546 = vmatprep.mubr.f32.mxu0 0.0
    %547 = vmatmul.mubr.f32.gmra.mrb[0].mxu0 %v480
    %v548 = vpop.f32.mrb[0].mxu0
    %v549 = vadd.f32 0.0, %v548
    %v550 = vpop.f32.mrb[0].mxu0
    %551 = vdwg.mxu0
    %v553 = vrot.slane %v549, 7
    %v556 = vadd.f32 %v241, %v553
    %v557 = vadd.f32 %v246, %v549
    %v558 = vxor.u32 %v556, 2147483648
    %v559 = vxor.u32 %v557, 2147483648
    %v560 = vmul.f32 %v558, 1.442695
    %v561 = vpow.pop %v560
    %v562 = vmul.f32 %v559, 1.442695
    %v563 = vpow.pop %v562
    %v564 = vadd.f32 %v561, 1.0
    %v565 = vadd.f32 %v563, 1.0
    %v566 = vrcp.pop %v564
    %v567 = vmul.f32 1.0, %v566
    %v568 = vrcp.pop %v565
    %v569 = vmul.f32 1.0, %v568
    %v570 = vmul.f32 %v567, 2.0
    %v571 = vmul.f32 %v569, 2.0
    %v572 = vsub.f32 %v570, 1.0
    %v573 = vsub.f32 %v571, 1.0
    %v576 = vrot.slane %v457, 7
    %v577 = vrot.slane %v458, 7
    %v580 = vmul.f32 %v567, %v576
    %v581 = vmul.f32 %v569, %v577
    %584 = vrot.lane.b32.xlu0 %v572, 64
    %v585 = vpop.permute.xlu0 %584
    %586 = vrot.lane.b32.xlu0 %v573, 64
    %v587 = vpop.permute.xlu0 %586
    %v590 = vmul.f32 %v567, %v585
    %v591 = vmul.f32 %v569, %v587
    %594 = vrot.lane.b32.xlu0 %v590, 32
    %v595 = vpop.permute.xlu0 %594
    %596 = vrot.lane.b32.xlu0 %v591, 32
    %v597 = vpop.permute.xlu0 %596
    %v600 = vadd.f32 %v580, %v595
    %v601 = vadd.f32 %v581, %v597
    %v602 = vtanh.pop %v600
    %v603 = vtanh.pop %v601
    %606 = vrot.lane.b32.xlu0 %v602, 64
    %v607 = vpop.permute.xlu0 %606
    %608 = vrot.lane.b32.xlu0 %v603, 64
    %v609 = vpop.permute.xlu0 %608
    %v612 = vmul.f32 %v567, %v607
    %v613 = vmul.f32 %v569, %v609
    %v616 = vrot.slane %v612, 1
    %v617 = vsel %vm474, %v613, %v616
    %618 = vrot.lane.b32.xlu0 %v617, 32
    %v619 = vpop.permute.xlu0 %618
    %v621 = vsel %vm255, %v619, %v479
    %v622 = vsel %vm167, %v619, 0
    %624 = vmatprep.subr.mxu0 0.0
    %625 = vmatpush1.msra.mxu0 %v53
    %626 = vmatprep.subr.mxu0 0.0
    %627 = vmatpush1.msra.mxu0 %v54
    %628 = vmatprep.subr.mxu0 0.0
    %629 = vmatpush1.msra.mxu0 %v55
    %630 = vmatprep.subr.mxu0 0.0
    %631 = vmatpush1.msra.mxu0 %v56
    %632 = vmatprep.subr.mxu0 0.0
    %633 = vmatpush1.msra.mxu0 0.0
    %634 = vmatprep.subr.mxu0 0.0
    %635 = vmatpush1.msra.mxu0 0.0
    %636 = vmatprep.subr.mxu0 0.0
    %637 = vmatpush1.msra.mxu0 0.0
    %638 = vmatprep.subr.mxu0 0.0
    %639 = vmatpush1.msra.mxu0 0.0
    %640 = vmatprep.subr.mxu0 0.0
    %641 = vmatpush1.msra.mxu0 0.0
    %642 = vmatprep.subr.mxu0 0.0
    %643 = vmatpush1.msra.mxu0 0.0
    %644 = vmatprep.subr.mxu0 0.0
    %645 = vmatpush1.msra.mxu0 0.0
    %646 = vmatprep.subr.mxu0 0.0
    %647 = vmatpush1.msra.mxu0 0.0
    %648 = vmatprep.subr.mxu0 0.0
    %649 = vmatpush1.msra.mxu0 0.0
    %650 = vmatprep.subr.mxu0 0.0
    %651 = vmatpush1.msra.mxu0 0.0
    %652 = vmatprep.subr.mxu0 0.0
    %653 = vmatpush1.msra.mxu0 0.0
    %654 = vmatprep.subr.mxu0 0.0
    %655 = vmatpush1.msra.mxu0 0.0
    %656 = vmatprep.subr.mxu0 0.0
    %657 = vmatpush1.msra.mxu0 0.0
    %658 = vmatprep.subr.mxu0 0.0
    %659 = vmatpush1.msra.mxu0 0.0
    %660 = vmatprep.subr.mxu0 0.0
    %661 = vmatpush1.msra.mxu0 0.0
    %662 = vmatprep.subr.mxu0 0.0
    %663 = vmatpush1.msra.mxu0 0.0
    %664 = vmatprep.subr.mxu0 0.0
    %665 = vmatpush1.msra.mxu0 0.0
    %666 = vmatprep.subr.mxu0 0.0
    %667 = vmatpush1.msra.mxu0 0.0
    %668 = vmatprep.subr.mxu0 0.0
    %669 = vmatpush1.msra.mxu0 0.0
    %670 = vmatprep.subr.mxu0 0.0
    %671 = vmatpush1.msra.mxu0 0.0
    %672 = vmatprep.subr.mxu0 0.0
    %673 = vmatpush1.msra.mxu0 0.0
    %674 = vmatprep.subr.mxu0 0.0
    %675 = vmatpush1.msra.mxu0 0.0
    %676 = vmatprep.subr.mxu0 0.0
    %677 = vmatpush1.msra.mxu0 0.0
    %678 = vmatprep.subr.mxu0 0.0
    %679 = vmatpush1.msra.mxu0 0.0
    %680 = vmatprep.subr.mxu0 0.0
    %681 = vmatpush1.msra.mxu0 0.0
    %682 = vmatprep.subr.mxu0 0.0
    %683 = vmatpush1.msra.mxu0 0.0
    %684 = vmatprep.subr.mxu0 0.0
    %685 = vmatpush1.msra.mxu0 0.0
    %686 = vmatprep.subr.mxu0 0.0
    %687 = vmatpush1.msra.mxu0 0.0
    %688 = vmatprep.mubr.f32.mxu0 0.0
    %689 = vmatmul.mubr.f32.gmra.mrb[0].mxu0 %v622
    %v690 = vpop.f32.mrb[0].mxu0
    %v691 = vadd.f32 0.0, %v690
    %v692 = vpop.f32.mrb[0].mxu0
    %693 = vdwg.mxu0
    %v695 = vrot.slane %v691, 6
    %v696 = vrot.slane %v691, 7
    %v699 = vadd.f32 %v241, %v695
    %v700 = vadd.f32 %v246, %v696
    %v701 = vxor.u32 %v699, 2147483648
    %v702 = vxor.u32 %v700, 2147483648
    %v703 = vmul.f32 %v701, 1.442695
    %v704 = vpow.pop %v703
    %v705 = vmul.f32 %v702, 1.442695
    %v706 = vpow.pop %v705
    %v707 = vadd.f32 %v704, 1.0
    %v708 = vadd.f32 %v706, 1.0
    %v709 = vrcp.pop %v707
    %v710 = vmul.f32 1.0, %v709
    %v711 = vrcp.pop %v708
    %v712 = vmul.f32 1.0, %v711
    %v713 = vmul.f32 %v710, 2.0
    %v714 = vmul.f32 %v712, 2.0
    %v715 = vsub.f32 %v713, 1.0
    %v716 = vsub.f32 %v714, 1.0
    %v719 = vrot.slane %v600, 7
    %v720 = vrot.slane %v601, 7
    %v723 = vmul.f32 %v710, %v719
    %v724 = vmul.f32 %v712, %v720
    %727 = vrot.lane.b32.xlu0 %v715, 64
    %v728 = vpop.permute.xlu0 %727
    %729 = vrot.lane.b32.xlu0 %v716, 64
    %v730 = vpop.permute.xlu0 %729
    %v733 = vmul.f32 %v710, %v728
    %v734 = vmul.f32 %v712, %v730
    %737 = vrot.lane.b32.xlu0 %v733, 32
    %v738 = vpop.permute.xlu0 %737
    %739 = vrot.lane.b32.xlu0 %v734, 32
    %v740 = vpop.permute.xlu0 %739
    %v743 = vadd.f32 %v723, %v738
    %v744 = vadd.f32 %v724, %v740
    %v745 = vtanh.pop %v743
    %v746 = vtanh.pop %v744
    %749 = vrot.lane.b32.xlu0 %v745, 64
    %v750 = vpop.permute.xlu0 %749
    %751 = vrot.lane.b32.xlu0 %v746, 64
    %v752 = vpop.permute.xlu0 %751
    %v755 = vmul.f32 %v710, %v750
    %v756 = vmul.f32 %v712, %v752
    %v759 = vrot.slane %v755, 2
    %v760 = vrot.slane %v756, 1
    %v761 = vsel %vm474, %v760, %v759
    %762 = vrot.lane.b32.xlu0 %v761, 32
    %v763 = vpop.permute.xlu0 %762
    %v765 = vsel %vm256, %v763, %v621
    %v766 = vsel %vm167, %v763, 0
    %768 = vmatprep.subr.mxu0 0.0
    %769 = vmatpush1.msra.mxu0 %v53
    %770 = vmatprep.subr.mxu0 0.0
    %771 = vmatpush1.msra.mxu0 %v54
    %772 = vmatprep.subr.mxu0 0.0
    %773 = vmatpush1.msra.mxu0 %v55
    %774 = vmatprep.subr.mxu0 0.0
    %775 = vmatpush1.msra.mxu0 %v56
    %776 = vmatprep.subr.mxu0 0.0
    %777 = vmatpush1.msra.mxu0 0.0
    %778 = vmatprep.subr.mxu0 0.0
    %779 = vmatpush1.msra.mxu0 0.0
    %780 = vmatprep.subr.mxu0 0.0
    %781 = vmatpush1.msra.mxu0 0.0
    %782 = vmatprep.subr.mxu0 0.0
    %783 = vmatpush1.msra.mxu0 0.0
    %784 = vmatprep.subr.mxu0 0.0
    %785 = vmatpush1.msra.mxu0 0.0
    %786 = vmatprep.subr.mxu0 0.0
    %787 = vmatpush1.msra.mxu0 0.0
    %788 = vmatprep.subr.mxu0 0.0
    %789 = vmatpush1.msra.mxu0 0.0
    %790 = vmatprep.subr.mxu0 0.0
    %791 = vmatpush1.msra.mxu0 0.0
    %792 = vmatprep.subr.mxu0 0.0
    %793 = vmatpush1.msra.mxu0 0.0
    %794 = vmatprep.subr.mxu0 0.0
    %795 = vmatpush1.msra.mxu0 0.0
    %796 = vmatprep.subr.mxu0 0.0
    %797 = vmatpush1.msra.mxu0 0.0
    %798 = vmatprep.subr.mxu0 0.0
    %799 = vmatpush1.msra.mxu0 0.0
    %800 = vmatprep.subr.mxu0 0.0
    %801 = vmatpush1.msra.mxu0 0.0
    %802 = vmatprep.subr.mxu0 0.0
    %803 = vmatpush1.msra.mxu0 0.0
    %804 = vmatprep.subr.mxu0 0.0
    %805 = vmatpush1.msra.mxu0 0.0
    %806 = vmatprep.subr.mxu0 0.0
    %807 = vmatpush1.msra.mxu0 0.0
    %808 = vmatprep.subr.mxu0 0.0
    %809 = vmatpush1.msra.mxu0 0.0
    %810 = vmatprep.subr.mxu0 0.0
    %811 = vmatpush1.msra.mxu0 0.0
    %812 = vmatprep.subr.mxu0 0.0
    %813 = vmatpush1.msra.mxu0 0.0
    %814 = vmatprep.subr.mxu0 0.0
    %815 = vmatpush1.msra.mxu0 0.0
    %816 = vmatprep.subr.mxu0 0.0
    %817 = vmatpush1.msra.mxu0 0.0
    %818 = vmatprep.subr.mxu0 0.0
    %819 = vmatpush1.msra.mxu0 0.0
    %820 = vmatprep.subr.mxu0 0.0
    %821 = vmatpush1.msra.mxu0 0.0
    %822 = vmatprep.subr.mxu0 0.0
    %823 = vmatpush1.msra.mxu0 0.0
    %824 = vmatprep.subr.mxu0 0.0
    %825 = vmatpush1.msra.mxu0 0.0
    %826 = vmatprep.subr.mxu0 0.0
    %827 = vmatpush1.msra.mxu0 0.0
    %828 = vmatprep.subr.mxu0 0.0
    %829 = vmatpush1.msra.mxu0 0.0
    %830 = vmatprep.subr.mxu0 0.0
    %831 = vmatpush1.msra.mxu0 0.0
    %832 = vmatprep.mubr.f32.mxu0 0.0
    %833 = vmatmul.mubr.f32.gmra.mrb[0].mxu0 %v766
    %v834 = vpop.f32.mrb[0].mxu0
    %v835 = vadd.f32 0.0, %v834
    %v836 = vpop.f32.mrb[0].mxu0
    %837 = vdwg.mxu0
    %v839 = vrot.slane %v835, 5
    %v840 = vrot.slane %v835, 6
    %v843 = vadd.f32 %v241, %v839
    %v844 = vadd.f32 %v246, %v840
    %v845 = vxor.u32 %v843, 2147483648
    %v846 = vxor.u32 %v844, 2147483648
    %v847 = vmul.f32 %v845, 1.442695
    %v848 = vpow.pop %v847
    %v849 = vmul.f32 %v846, 1.442695
    %v850 = vpow.pop %v849
    %v851 = vadd.f32 %v848, 1.0
    %v852 = vadd.f32 %v850, 1.0
    %v853 = vrcp.pop %v851
    %v854 = vmul.f32 1.0, %v853
    %v855 = vrcp.pop %v852
    %v856 = vmul.f32 1.0, %v855
    %v857 = vmul.f32 %v854, 2.0
    %v858 = vmul.f32 %v856, 2.0
    %v859 = vsub.f32 %v857, 1.0
    %v860 = vsub.f32 %v858, 1.0
    %v863 = vrot.slane %v743, 7
    %v864 = vrot.slane %v744, 7
    %v867 = vmul.f32 %v854, %v863
    %v868 = vmul.f32 %v856, %v864
    %871 = vrot.lane.b32.xlu0 %v859, 64
    %v872 = vpop.permute.xlu0 %871
    %873 = vrot.lane.b32.xlu0 %v860, 64
    %v874 = vpop.permute.xlu0 %873
    %v877 = vmul.f32 %v854, %v872
    %v878 = vmul.f32 %v856, %v874
    %881 = vrot.lane.b32.xlu0 %v877, 32
    %v882 = vpop.permute.xlu0 %881
    %883 = vrot.lane.b32.xlu0 %v878, 32
    %v884 = vpop.permute.xlu0 %883
    %v887 = vadd.f32 %v867, %v882
    %v888 = vadd.f32 %v868, %v884
    %v889 = vtanh.pop %v887
    %v890 = vtanh.pop %v888
    %893 = vrot.lane.b32.xlu0 %v889, 64
    %v894 = vpop.permute.xlu0 %893
    %895 = vrot.lane.b32.xlu0 %v890, 64
    %v896 = vpop.permute.xlu0 %895
    %v899 = vmul.f32 %v854, %v894
    %v900 = vmul.f32 %v856, %v896
    %v903 = vrot.slane %v899, 3
    %v904 = vrot.slane %v900, 2
    %v905 = vsel %vm474, %v904, %v903
    %906 = vrot.lane.b32.xlu0 %v905, 32
    %v907 = vpop.permute.xlu0 %906
    %v909 = vsel %vm257, %v907, %v765
    %v910 = vsel %vm167, %v907, 0
    %912 = vmatprep.subr.mxu0 0.0
    %913 = vmatpush1.msra.mxu0 %v53
    %914 = vmatprep.subr.mxu0 0.0
    %915 = vmatpush1.msra.mxu0 %v54
    %916 = vmatprep.subr.mxu0 0.0
    %917 = vmatpush1.msra.mxu0 %v55
    %918 = vmatprep.subr.mxu0 0.0
    %919 = vmatpush1.msra.mxu0 %v56
    %920 = vmatprep.subr.mxu0 0.0
    %921 = vmatpush1.msra.mxu0 0.0
    %922 = vmatprep.subr.mxu0 0.0
    %923 = vmatpush1.msra.mxu0 0.0
    %924 = vmatprep.subr.mxu0 0.0
    %925 = vmatpush1.msra.mxu0 0.0
    %926 = vmatprep.subr.mxu0 0.0
    %927 = vmatpush1.msra.mxu0 0.0
    %928 = vmatprep.subr.mxu0 0.0
    %929 = vmatpush1.msra.mxu0 0.0
    %930 = vmatprep.subr.mxu0 0.0
    %931 = vmatpush1.msra.mxu0 0.0
    %932 = vmatprep.subr.mxu0 0.0
    %933 = vmatpush1.msra.mxu0 0.0
    %934 = vmatprep.subr.mxu0 0.0
    %935 = vmatpush1.msra.mxu0 0.0
    %936 = vmatprep.subr.mxu0 0.0
    %937 = vmatpush1.msra.mxu0 0.0
    %938 = vmatprep.subr.mxu0 0.0
    %939 = vmatpush1.msra.mxu0 0.0
    %940 = vmatprep.subr.mxu0 0.0
    %941 = vmatpush1.msra.mxu0 0.0
    %942 = vmatprep.subr.mxu0 0.0
    %943 = vmatpush1.msra.mxu0 0.0
    %944 = vmatprep.subr.mxu0 0.0
    %945 = vmatpush1.msra.mxu0 0.0
    %946 = vmatprep.subr.mxu0 0.0
    %947 = vmatpush1.msra.mxu0 0.0
    %948 = vmatprep.subr.mxu0 0.0
    %949 = vmatpush1.msra.mxu0 0.0
    %950 = vmatprep.subr.mxu0 0.0
    %951 = vmatpush1.msra.mxu0 0.0
    %952 = vmatprep.subr.mxu0 0.0
    %953 = vmatpush1.msra.mxu0 0.0
    %954 = vmatprep.subr.mxu0 0.0
    %955 = vmatpush1.msra.mxu0 0.0
    %956 = vmatprep.subr.mxu0 0.0
    %957 = vmatpush1.msra.mxu0 0.0
    %958 = vmatprep.subr.mxu0 0.0
    %959 = vmatpush1.msra.mxu0 0.0
    %960 = vmatprep.subr.mxu0 0.0
    %961 = vmatpush1.msra.mxu0 0.0
    %962 = vmatprep.subr.mxu0 0.0
    %963 = vmatpush1.msra.mxu0 0.0
    %964 = vmatprep.subr.mxu0 0.0
    %965 = vmatpush1.msra.mxu0 0.0
    %966 = vmatprep.subr.mxu0 0.0
    %967 = vmatpush1.msra.mxu0 0.0
    %968 = vmatprep.subr.mxu0 0.0
    %969 = vmatpush1.msra.mxu0 0.0
    %970 = vmatprep.subr.mxu0 0.0
    %971 = vmatpush1.msra.mxu0 0.0
    %972 = vmatprep.subr.mxu0 0.0
    %973 = vmatpush1.msra.mxu0 0.0
    %974 = vmatprep.subr.mxu0 0.0
    %975 = vmatpush1.msra.mxu0 0.0
    %976 = vmatprep.mubr.f32.mxu0 0.0
    %977 = vmatmul.mubr.f32.gmra.mrb[0].mxu0 %v910
    %v978 = vpop.f32.mrb[0].mxu0
    %v979 = vadd.f32 0.0, %v978
    %v980 = vpop.f32.mrb[0].mxu0
    %981 = vdwg.mxu0
    %v983 = vrot.slane %v979, 4
    %v984 = vrot.slane %v979, 5
    %v987 = vadd.f32 %v241, %v983
    %v988 = vadd.f32 %v246, %v984
    %v989 = vxor.u32 %v987, 2147483648
    %v990 = vxor.u32 %v988, 2147483648
    %v991 = vmul.f32 %v989, 1.442695
    %v992 = vpow.pop %v991
    %v993 = vmul.f32 %v990, 1.442695
    %v994 = vpow.pop %v993
    %v995 = vadd.f32 %v992, 1.0
    %v996 = vadd.f32 %v994, 1.0
    %v997 = vrcp.pop %v995
    %v998 = vmul.f32 1.0, %v997
    %v999 = vrcp.pop %v996
    %v1000 = vmul.f32 1.0, %v999
    %v1001 = vmul.f32 %v998, 2.0
    %v1002 = vmul.f32 %v1000, 2.0
    %v1003 = vsub.f32 %v1001, 1.0
    %v1004 = vsub.f32 %v1002, 1.0
    %v1007 = vrot.slane %v887, 7
    %v1008 = vrot.slane %v888, 7
    %v1011 = vmul.f32 %v998, %v1007
    %v1012 = vmul.f32 %v1000, %v1008
    %1015 = vrot.lane.b32.xlu0 %v1003, 64
    %v1016 = vpop.permute.xlu0 %1015
    %1017 = vrot.lane.b32.xlu0 %v1004, 64
    %v1018 = vpop.permute.xlu0 %1017
    %v1021 = vmul.f32 %v998, %v1016
    %v1022 = vmul.f32 %v1000, %v1018
    %1025 = vrot.lane.b32.xlu0 %v1021, 32
    %v1026 = vpop.permute.xlu0 %1025
    %1027 = vrot.lane.b32.xlu0 %v1022, 32
    %v1028 = vpop.permute.xlu0 %1027
    %v1031 = vadd.f32 %v1011, %v1026
    %v1032 = vadd.f32 %v1012, %v1028
    %v1033 = vtanh.pop %v1031
    %v1034 = vtanh.pop %v1032
    %1037 = vrot.lane.b32.xlu0 %v1033, 64
    %v1038 = vpop.permute.xlu0 %1037
    %1039 = vrot.lane.b32.xlu0 %v1034, 64
    %v1040 = vpop.permute.xlu0 %1039
    %v1043 = vmul.f32 %v998, %v1038
    %v1044 = vmul.f32 %v1000, %v1040
    %v1047 = vrot.slane %v1043, 4
    %v1048 = vrot.slane %v1044, 3
    %v1049 = vsel %vm474, %v1048, %v1047
    %1050 = vrot.lane.b32.xlu0 %v1049, 32
    %v1051 = vpop.permute.xlu0 %1050
    %v1053 = vsel %vm258, %v1051, %v909
    %v1054 = vsel %vm167, %v1051, 0
    %1056 = vmatprep.subr.mxu0 0.0
    %1057 = vmatpush1.msra.mxu0 %v53
    %1058 = vmatprep.subr.mxu0 0.0
    %1059 = vmatpush1.msra.mxu0 %v54
    %1060 = vmatprep.subr.mxu0 0.0
    %1061 = vmatpush1.msra.mxu0 %v55
    %1062 = vmatprep.subr.mxu0 0.0
    %1063 = vmatpush1.msra.mxu0 %v56
    %1064 = vmatprep.subr.mxu0 0.0
    %1065 = vmatpush1.msra.mxu0 0.0
    %1066 = vmatprep.subr.mxu0 0.0
    %1067 = vmatpush1.msra.mxu0 0.0
    %1068 = vmatprep.subr.mxu0 0.0
    %1069 = vmatpush1.msra.mxu0 0.0
    %1070 = vmatprep.subr.mxu0 0.0
    %1071 = vmatpush1.msra.mxu0 0.0
    %1072 = vmatprep.subr.mxu0 0.0
    %1073 = vmatpush1.msra.mxu0 0.0
    %1074 = vmatprep.subr.mxu0 0.0
    %1075 = vmatpush1.msra.mxu0 0.0
    %1076 = vmatprep.subr.mxu0 0.0
    %1077 = vmatpush1.msra.mxu0 0.0
    %1078 = vmatprep.subr.mxu0 0.0
    %1079 = vmatpush1.msra.mxu0 0.0
    %1080 = vmatprep.subr.mxu0 0.0
    %1081 = vmatpush1.msra.mxu0 0.0
    %1082 = vmatprep.subr.mxu0 0.0
    %1083 = vmatpush1.msra.mxu0 0.0
    %1084 = vmatprep.subr.mxu0 0.0
    %1085 = vmatpush1.msra.mxu0 0.0
    %1086 = vmatprep.subr.mxu0 0.0
    %1087 = vmatpush1.msra.mxu0 0.0
    %1088 = vmatprep.subr.mxu0 0.0
    %1089 = vmatpush1.msra.mxu0 0.0
    %1090 = vmatprep.subr.mxu0 0.0
    %1091 = vmatpush1.msra.mxu0 0.0
    %1092 = vmatprep.subr.mxu0 0.0
    %1093 = vmatpush1.msra.mxu0 0.0
    %1094 = vmatprep.subr.mxu0 0.0
    %1095 = vmatpush1.msra.mxu0 0.0
    %1096 = vmatprep.subr.mxu0 0.0
    %1097 = vmatpush1.msra.mxu0 0.0
    %1098 = vmatprep.subr.mxu0 0.0
    %1099 = vmatpush1.msra.mxu0 0.0
    %1100 = vmatprep.subr.mxu0 0.0
    %1101 = vmatpush1.msra.mxu0 0.0
    %1102 = vmatprep.subr.mxu0 0.0
    %1103 = vmatpush1.msra.mxu0 0.0
    %1104 = vmatprep.subr.mxu0 0.0
    %1105 = vmatpush1.msra.mxu0 0.0
    %1106 = vmatprep.subr.mxu0 0.0
    %1107 = vmatpush1.msra.mxu0 0.0
    %1108 = vmatprep.subr.mxu0 0.0
    %1109 = vmatpush1.msra.mxu0 0.0
    %1110 = vmatprep.subr.mxu0 0.0
    %1111 = vmatpush1.msra.mxu0 0.0
    %1112 = vmatprep.subr.mxu0 0.0
    %1113 = vmatpush1.msra.mxu0 0.0
    %1114 = vmatprep.subr.mxu0 0.0
    %1115 = vmatpush1.msra.mxu0 0.0
    %1116 = vmatprep.subr.mxu0 0.0
    %1117 = vmatpush1.msra.mxu0 0.0
    %1118 = vmatprep.subr.mxu0 0.0
    %1119 = vmatpush1.msra.mxu0 0.0
    %1120 = vmatprep.mubr.f32.mxu0 0.0
    %1121 = vmatmul.mubr.f32.gmra.mrb[0].mxu0 %v1054
    %v1122 = vpop.f32.mrb[0].mxu0
    %v1123 = vadd.f32 0.0, %v1122
    %v1124 = vpop.f32.mrb[0].mxu0
    %1125 = vdwg.mxu0
    %v1127 = vrot.slane %v1123, 3
    %v1128 = vrot.slane %v1123, 4
    %v1131 = vadd.f32 %v241, %v1127
    %v1132 = vadd.f32 %v246, %v1128
    %v1133 = vxor.u32 %v1131, 2147483648
    %v1134 = vxor.u32 %v1132, 2147483648
    %v1135 = vmul.f32 %v1133, 1.442695
    %v1136 = vpow.pop %v1135
    %v1137 = vmul.f32 %v1134, 1.442695
    %v1138 = vpow.pop %v1137
    %v1139 = vadd.f32 %v1136, 1.0
    %v1140 = vadd.f32 %v1138, 1.0
    %v1141 = vrcp.pop %v1139
    %v1142 = vmul.f32 1.0, %v1141
    %v1143 = vrcp.pop %v1140
    %v1144 = vmul.f32 1.0, %v1143
    %v1145 = vmul.f32 %v1142, 2.0
    %v1146 = vmul.f32 %v1144, 2.0
    %v1147 = vsub.f32 %v1145, 1.0
    %v1148 = vsub.f32 %v1146, 1.0
    %v1151 = vrot.slane %v1031, 7
    %v1152 = vrot.slane %v1032, 7
    %v1155 = vmul.f32 %v1142, %v1151
    %v1156 = vmul.f32 %v1144, %v1152
    %1159 = vrot.lane.b32.xlu0 %v1147, 64
    %v1160 = vpop.permute.xlu0 %1159
    %1161 = vrot.lane.b32.xlu0 %v1148, 64
    %v1162 = vpop.permute.xlu0 %1161
    %v1165 = vmul.f32 %v1142, %v1160
    %v1166 = vmul.f32 %v1144, %v1162
    %1169 = vrot.lane.b32.xlu0 %v1165, 32
    %v1170 = vpop.permute.xlu0 %1169
    %1171 = vrot.lane.b32.xlu0 %v1166, 32
    %v1172 = vpop.permute.xlu0 %1171
    %v1175 = vadd.f32 %v1155, %v1170
    %v1176 = vadd.f32 %v1156, %v1172
    %v1177 = vtanh.pop %v1175
    %v1178 = vtanh.pop %v1176
    %1181 = vrot.lane.b32.xlu0 %v1177, 64
    %v1182 = vpop.permute.xlu0 %1181
    %1183 = vrot.lane.b32.xlu0 %v1178, 64
    %v1184 = vpop.permute.xlu0 %1183
    %v1187 = vmul.f32 %v1142, %v1182
    %v1188 = vmul.f32 %v1144, %v1184
    %v1191 = vrot.slane %v1187, 5
    %v1192 = vrot.slane %v1188, 4
    %v1193 = vsel %vm474, %v1192, %v1191
    %1194 = vrot.lane.b32.xlu0 %v1193, 32
    %v1195 = vpop.permute.xlu0 %1194
    %v1197 = vsel %vm259, %v1195, %v1053
    %v1198 = vsel %vm167, %v1195, 0
    %1200 = vmatprep.subr.mxu0 0.0
    %1201 = vmatpush1.msra.mxu0 %v53
    %1202 = vmatprep.subr.mxu0 0.0
    %1203 = vmatpush1.msra.mxu0 %v54
    %1204 = vmatprep.subr.mxu0 0.0
    %1205 = vmatpush1.msra.mxu0 %v55
    %1206 = vmatprep.subr.mxu0 0.0
    %1207 = vmatpush1.msra.mxu0 %v56
    %1208 = vmatprep.subr.mxu0 0.0
    %1209 = vmatpush1.msra.mxu0 0.0
    %1210 = vmatprep.subr.mxu0 0.0
    %1211 = vmatpush1.msra.mxu0 0.0
    %1212 = vmatprep.subr.mxu0 0.0
    %1213 = vmatpush1.msra.mxu0 0.0
    %1214 = vmatprep.subr.mxu0 0.0
    %1215 = vmatpush1.msra.mxu0 0.0
    %1216 = vmatprep.subr.mxu0 0.0
    %1217 = vmatpush1.msra.mxu0 0.0
    %1218 = vmatprep.subr.mxu0 0.0
    %1219 = vmatpush1.msra.mxu0 0.0
    %1220 = vmatprep.subr.mxu0 0.0
    %1221 = vmatpush1.msra.mxu0 0.0
    %1222 = vmatprep.subr.mxu0 0.0
    %1223 = vmatpush1.msra.mxu0 0.0
    %1224 = vmatprep.subr.mxu0 0.0
    %1225 = vmatpush1.msra.mxu0 0.0
    %1226 = vmatprep.subr.mxu0 0.0
    %1227 = vmatpush1.msra.mxu0 0.0
    %1228 = vmatprep.subr.mxu0 0.0
    %1229 = vmatpush1.msra.mxu0 0.0
    %1230 = vmatprep.subr.mxu0 0.0
    %1231 = vmatpush1.msra.mxu0 0.0
    %1232 = vmatprep.subr.mxu0 0.0
    %1233 = vmatpush1.msra.mxu0 0.0
    %1234 = vmatprep.subr.mxu0 0.0
    %1235 = vmatpush1.msra.mxu0 0.0
    %1236 = vmatprep.subr.mxu0 0.0
    %1237 = vmatpush1.msra.mxu0 0.0
    %1238 = vmatprep.subr.mxu0 0.0
    %1239 = vmatpush1.msra.mxu0 0.0
    %1240 = vmatprep.subr.mxu0 0.0
    %1241 = vmatpush1.msra.mxu0 0.0
    %1242 = vmatprep.subr.mxu0 0.0
    %1243 = vmatpush1.msra.mxu0 0.0
    %1244 = vmatprep.subr.mxu0 0.0
    %1245 = vmatpush1.msra.mxu0 0.0
    %1246 = vmatprep.subr.mxu0 0.0
    %1247 = vmatpush1.msra.mxu0 0.0
    %1248 = vmatprep.subr.mxu0 0.0
    %1249 = vmatpush1.msra.mxu0 0.0
    %1250 = vmatprep.subr.mxu0 0.0
    %1251 = vmatpush1.msra.mxu0 0.0
    %1252 = vmatprep.subr.mxu0 0.0
    %1253 = vmatpush1.msra.mxu0 0.0
    %1254 = vmatprep.subr.mxu0 0.0
    %1255 = vmatpush1.msra.mxu0 0.0
    %1256 = vmatprep.subr.mxu0 0.0
    %1257 = vmatpush1.msra.mxu0 0.0
    %1258 = vmatprep.subr.mxu0 0.0
    %1259 = vmatpush1.msra.mxu0 0.0
    %1260 = vmatprep.subr.mxu0 0.0
    %1261 = vmatpush1.msra.mxu0 0.0
    %1262 = vmatprep.subr.mxu0 0.0
    %1263 = vmatpush1.msra.mxu0 0.0
    %1264 = vmatprep.mubr.f32.mxu0 0.0
    %1265 = vmatmul.mubr.f32.gmra.mrb[0].mxu0 %v1198
    %v1266 = vpop.f32.mrb[0].mxu0
    %v1267 = vadd.f32 0.0, %v1266
    %v1268 = vpop.f32.mrb[0].mxu0
    %1269 = vdwg.mxu0
    %v1271 = vrot.slane %v1267, 2
    %v1272 = vrot.slane %v1267, 3
    %v1275 = vadd.f32 %v241, %v1271
    %v1276 = vadd.f32 %v246, %v1272
    %v1277 = vxor.u32 %v1275, 2147483648
    %v1278 = vxor.u32 %v1276, 2147483648
    %v1279 = vmul.f32 %v1277, 1.442695
    %v1280 = vpow.pop %v1279
    %v1281 = vmul.f32 %v1278, 1.442695
    %v1282 = vpow.pop %v1281
    %v1283 = vadd.f32 %v1280, 1.0
    %v1284 = vadd.f32 %v1282, 1.0
    %v1285 = vrcp.pop %v1283
    %v1286 = vmul.f32 1.0, %v1285
    %v1287 = vrcp.pop %v1284
    %v1288 = vmul.f32 1.0, %v1287
    %v1289 = vmul.f32 %v1286, 2.0
    %v1290 = vmul.f32 %v1288, 2.0
    %v1291 = vsub.f32 %v1289, 1.0
    %v1292 = vsub.f32 %v1290, 1.0
    %v1295 = vrot.slane %v1175, 7
    %v1296 = vrot.slane %v1176, 7
    %v1299 = vmul.f32 %v1286, %v1295
    %v1300 = vmul.f32 %v1288, %v1296
    %1303 = vrot.lane.b32.xlu0 %v1291, 64
    %v1304 = vpop.permute.xlu0 %1303
    %1305 = vrot.lane.b32.xlu0 %v1292, 64
    %v1306 = vpop.permute.xlu0 %1305
    %v1309 = vmul.f32 %v1286, %v1304
    %v1310 = vmul.f32 %v1288, %v1306
    %1313 = vrot.lane.b32.xlu0 %v1309, 32
    %v1314 = vpop.permute.xlu0 %1313
    %1315 = vrot.lane.b32.xlu0 %v1310, 32
    %v1316 = vpop.permute.xlu0 %1315
    %v1319 = vadd.f32 %v1299, %v1314
    %v1320 = vadd.f32 %v1300, %v1316
    %v1321 = vtanh.pop %v1319
    %v1322 = vtanh.pop %v1320
    %1325 = vrot.lane.b32.xlu0 %v1321, 64
    %v1326 = vpop.permute.xlu0 %1325
    %1327 = vrot.lane.b32.xlu0 %v1322, 64
    %v1328 = vpop.permute.xlu0 %1327
    %v1331 = vmul.f32 %v1286, %v1326
    %v1332 = vmul.f32 %v1288, %v1328
    %v1335 = vrot.slane %v1331, 6
    %v1336 = vrot.slane %v1332, 5
    %v1337 = vsel %vm474, %v1336, %v1335
    %1338 = vrot.lane.b32.xlu0 %v1337, 32
    %v1339 = vpop.permute.xlu0 %1338
    %v1341 = vsel %vm260, %v1339, %v1197
    %v1342 = vsel %vm167, %v1339, 0
    %1344 = vmatprep.subr.mxu0 0.0
    %1345 = vmatpush1.msra.mxu0 %v53
    %1346 = vmatprep.subr.mxu0 0.0
    %1347 = vmatpush1.msra.mxu0 %v54
    %1348 = vmatprep.subr.mxu0 0.0
    %1349 = vmatpush1.msra.mxu0 %v55
    %1350 = vmatprep.subr.mxu0 0.0
    %1351 = vmatpush1.msra.mxu0 %v56
    %1352 = vmatprep.subr.mxu0 0.0
    %1353 = vmatpush1.msra.mxu0 0.0
    %1354 = vmatprep.subr.mxu0 0.0
    %1355 = vmatpush1.msra.mxu0 0.0
    %1356 = vmatprep.subr.mxu0 0.0
    %1357 = vmatpush1.msra.mxu0 0.0
    %1358 = vmatprep.subr.mxu0 0.0
    %1359 = vmatpush1.msra.mxu0 0.0
    %1360 = vmatprep.subr.mxu0 0.0
    %1361 = vmatpush1.msra.mxu0 0.0
    %1362 = vmatprep.subr.mxu0 0.0
    %1363 = vmatpush1.msra.mxu0 0.0
    %1364 = vmatprep.subr.mxu0 0.0
    %1365 = vmatpush1.msra.mxu0 0.0
    %1366 = vmatprep.subr.mxu0 0.0
    %1367 = vmatpush1.msra.mxu0 0.0
    %1368 = vmatprep.subr.mxu0 0.0
    %1369 = vmatpush1.msra.mxu0 0.0
    %1370 = vmatprep.subr.mxu0 0.0
    %1371 = vmatpush1.msra.mxu0 0.0
    %1372 = vmatprep.subr.mxu0 0.0
    %1373 = vmatpush1.msra.mxu0 0.0
    %1374 = vmatprep.subr.mxu0 0.0
    %1375 = vmatpush1.msra.mxu0 0.0
    %1376 = vmatprep.subr.mxu0 0.0
    %1377 = vmatpush1.msra.mxu0 0.0
    %1378 = vmatprep.subr.mxu0 0.0
    %1379 = vmatpush1.msra.mxu0 0.0
    %1380 = vmatprep.subr.mxu0 0.0
    %1381 = vmatpush1.msra.mxu0 0.0
    %1382 = vmatprep.subr.mxu0 0.0
    %1383 = vmatpush1.msra.mxu0 0.0
    %1384 = vmatprep.subr.mxu0 0.0
    %1385 = vmatpush1.msra.mxu0 0.0
    %1386 = vmatprep.subr.mxu0 0.0
    %1387 = vmatpush1.msra.mxu0 0.0
    %1388 = vmatprep.subr.mxu0 0.0
    %1389 = vmatpush1.msra.mxu0 0.0
    %1390 = vmatprep.subr.mxu0 0.0
    %1391 = vmatpush1.msra.mxu0 0.0
    %1392 = vmatprep.subr.mxu0 0.0
    %1393 = vmatpush1.msra.mxu0 0.0
    %1394 = vmatprep.subr.mxu0 0.0
    %1395 = vmatpush1.msra.mxu0 0.0
    %1396 = vmatprep.subr.mxu0 0.0
    %1397 = vmatpush1.msra.mxu0 0.0
    %1398 = vmatprep.subr.mxu0 0.0
    %1399 = vmatpush1.msra.mxu0 0.0
    %1400 = vmatprep.subr.mxu0 0.0
    %1401 = vmatpush1.msra.mxu0 0.0
    %1402 = vmatprep.subr.mxu0 0.0
    %1403 = vmatpush1.msra.mxu0 0.0
    %1404 = vmatprep.subr.mxu0 0.0
    %1405 = vmatpush1.msra.mxu0 0.0
    %1406 = vmatprep.subr.mxu0 0.0
    %1407 = vmatpush1.msra.mxu0 0.0
    %1408 = vmatprep.mubr.f32.mxu0 0.0
    %1409 = vmatmul.mubr.f32.gmra.mrb[0].mxu0 %v1342
    %v1410 = vpop.f32.mrb[0].mxu0
    %v1411 = vadd.f32 0.0, %v1410
    %v1412 = vpop.f32.mrb[0].mxu0
    %1413 = vdwg.mxu0
    %v1415 = vrot.slane %v1411, 1
    %v1416 = vrot.slane %v1411, 2
    %v1419 = vadd.f32 %v241, %v1415
    %v1420 = vadd.f32 %v246, %v1416
    %v1421 = vxor.u32 %v1419, 2147483648
    %v1422 = vxor.u32 %v1420, 2147483648
    %v1423 = vmul.f32 %v1421, 1.442695
    %v1424 = vpow.pop %v1423
    %v1425 = vmul.f32 %v1422, 1.442695
    %v1426 = vpow.pop %v1425
    %v1427 = vadd.f32 %v1424, 1.0
    %v1428 = vadd.f32 %v1426, 1.0
    %v1429 = vrcp.pop %v1427
    %v1430 = vmul.f32 1.0, %v1429
    %v1431 = vrcp.pop %v1428
    %v1432 = vmul.f32 1.0, %v1431
    %v1433 = vmul.f32 %v1430, 2.0
    %v1434 = vmul.f32 %v1432, 2.0
    %v1435 = vsub.f32 %v1433, 1.0
    %v1436 = vsub.f32 %v1434, 1.0
    %v1439 = vrot.slane %v1319, 7
    %v1440 = vrot.slane %v1320, 7
    %v1443 = vmul.f32 %v1430, %v1439
    %v1444 = vmul.f32 %v1432, %v1440
    %1447 = vrot.lane.b32.xlu0 %v1435, 64
    %v1448 = vpop.permute.xlu0 %1447
    %1449 = vrot.lane.b32.xlu0 %v1436, 64
    %v1450 = vpop.permute.xlu0 %1449
    %v1453 = vmul.f32 %v1430, %v1448
    %v1454 = vmul.f32 %v1432, %v1450
    %1457 = vrot.lane.b32.xlu0 %v1453, 32
    %v1458 = vpop.permute.xlu0 %1457
    %1459 = vrot.lane.b32.xlu0 %v1454, 32
    %v1460 = vpop.permute.xlu0 %1459
    %v1463 = vadd.f32 %v1443, %v1458
    %v1464 = vadd.f32 %v1444, %v1460
    %v1465 = vtanh.pop %v1463
    %v1466 = vtanh.pop %v1464
    %1469 = vrot.lane.b32.xlu0 %v1465, 64
    %v1470 = vpop.permute.xlu0 %1469
    %1471 = vrot.lane.b32.xlu0 %v1466, 64
    %v1472 = vpop.permute.xlu0 %1471
    %v1475 = vmul.f32 %v1430, %v1470
    %v1476 = vmul.f32 %v1432, %v1472
    %v1479 = vrot.slane %v1475, 7
    %v1480 = vrot.slane %v1476, 6
    %v1481 = vsel %vm474, %v1480, %v1479
    %1482 = vrot.lane.b32.xlu0 %v1481, 32
    %v1483 = vpop.permute.xlu0 %1482
    %v1485 = vsel %vm261, %v1483, %v1341
    %v1487 = vsel %vm167, %v1485, 0
    %1489 = vmatprep.subr.mxu0 0.0
    %1490 = vmatpush1.msra.mxu0 %v57
    %1491 = vmatprep.subr.mxu0 0.0
    %1492 = vmatpush1.msra.mxu0 %v58
    %1493 = vmatprep.subr.mxu0 0.0
    %1494 = vmatpush1.msra.mxu0 %v59
    %1495 = vmatprep.subr.mxu0 0.0
    %1496 = vmatpush1.msra.mxu0 %v60
    %1497 = vmatprep.subr.mxu0 0.0
    %1498 = vmatpush1.msra.mxu0 0.0
    %1499 = vmatprep.subr.mxu0 0.0
    %1500 = vmatpush1.msra.mxu0 0.0
    %1501 = vmatprep.subr.mxu0 0.0
    %1502 = vmatpush1.msra.mxu0 0.0
    %1503 = vmatprep.subr.mxu0 0.0
    %1504 = vmatpush1.msra.mxu0 0.0
    %1505 = vmatprep.subr.mxu0 0.0
    %1506 = vmatpush1.msra.mxu0 0.0
    %1507 = vmatprep.subr.mxu0 0.0
    %1508 = vmatpush1.msra.mxu0 0.0
    %1509 = vmatprep.subr.mxu0 0.0
    %1510 = vmatpush1.msra.mxu0 0.0
    %1511 = vmatprep.subr.mxu0 0.0
    %1512 = vmatpush1.msra.mxu0 0.0
    %1513 = vmatprep.subr.mxu0 0.0
    %1514 = vmatpush1.msra.mxu0 0.0
    %1515 = vmatprep.subr.mxu0 0.0
    %1516 = vmatpush1.msra.mxu0 0.0
    %1517 = vmatprep.subr.mxu0 0.0
    %1518 = vmatpush1.msra.mxu0 0.0
    %1519 = vmatprep.subr.mxu0 0.0
    %1520 = vmatpush1.msra.mxu0 0.0
    %1521 = vmatprep.subr.mxu0 0.0
    %1522 = vmatpush1.msra.mxu0 0.0
    %1523 = vmatprep.subr.mxu0 0.0
    %1524 = vmatpush1.msra.mxu0 0.0
    %1525 = vmatprep.subr.mxu0 0.0
    %1526 = vmatpush1.msra.mxu0 0.0
    %1527 = vmatprep.subr.mxu0 0.0
    %1528 = vmatpush1.msra.mxu0 0.0
    %1529 = vmatprep.subr.mxu0 0.0
    %1530 = vmatpush1.msra.mxu0 0.0
    %1531 = vmatprep.subr.mxu0 0.0
    %1532 = vmatpush1.msra.mxu0 0.0
    %1533 = vmatprep.subr.mxu0 0.0
    %1534 = vmatpush1.msra.mxu0 0.0
    %1535 = vmatprep.subr.mxu0 0.0
    %1536 = vmatpush1.msra.mxu0 0.0
    %1537 = vmatprep.subr.mxu0 0.0
    %1538 = vmatpush1.msra.mxu0 0.0
    %1539 = vmatprep.subr.mxu0 0.0
    %1540 = vmatpush1.msra.mxu0 0.0
    %1541 = vmatprep.subr.mxu0 0.0
    %1542 = vmatpush1.msra.mxu0 0.0
    %1543 = vmatprep.subr.mxu0 0.0
    %1544 = vmatpush1.msra.mxu0 0.0
    %1545 = vmatprep.subr.mxu0 0.0
    %1546 = vmatpush1.msra.mxu0 0.0
    %1547 = vmatprep.subr.mxu0 0.0
    %1548 = vmatpush1.msra.mxu0 0.0
    %1549 = vmatprep.subr.mxu0 0.0
    %1550 = vmatpush1.msra.mxu0 0.0
    %1551 = vmatprep.subr.mxu0 0.0
    %1552 = vmatpush1.msra.mxu0 0.0
    %1553 = vmatprep.mubr.f32.mxu0 0.0
    %1554 = vmatmul.mubr.f32.gmra.mrb[0].mxu0 %v1487
    %v1555 = vpop.f32.mrb[0].mxu0
    %v1556 = vadd.f32 %v420, %v1555
    %v1557 = vpop.f32.mrb[0].mxu0
    %1558 = vdwg.mxu0
    %v1559 = vmax.f32 %v1556, 0.0
    %v1560 = vlaneseq
    %v1561 = vshrl.u32 %v1560, 7
    %v1562 = vsub.s32 3, %v1561
    %v1563 = vrot.slane %v72, %v1562
    %vm1564 = vcmask 523264
    %v1566 = vsel %vm1564, %v1559, 0
    %1568 = vmatprep.subr.mxu0 0.0
    %1569 = vmatpush1.msra.mxu0 %v64
    %1570 = vmatprep.subr.mxu0 0.0
    %1571 = vmatpush1.msra.mxu0 %v65
    %1572 = vmatprep.subr.mxu0 0.0
    %1573 = vmatpush1.msra.mxu0 %v66
    %1574 = vmatprep.subr.mxu0 0.0
    %1575 = vmatpush1.msra.mxu0 %v67
    %1576 = vmatprep.subr.mxu0 0.0
    %1577 = vmatpush1.msra.mxu0 %v68
    %1578 = vmatprep.subr.mxu0 0.0
    %1579 = vmatpush1.msra.mxu0 %v69
    %1580 = vmatprep.subr.mxu0 0.0
    %1581 = vmatpush1.msra.mxu0 %v70
    %1582 = vmatprep.subr.mxu0 0.0
    %1583 = vmatpush1.msra.mxu0 %v71
    %1584 = vmatprep.subr.mxu0 0.0
    %1585 = vmatpush1.msra.mxu0 0.0
    %1586 = vmatprep.subr.mxu0 0.0
    %1587 = vmatpush1.msra.mxu0 0.0
    %1588 = vmatprep.subr.mxu0 0.0
    %1589 = vmatpush1.msra.mxu0 0.0
    %1590 = vmatprep.subr.mxu0 0.0
    %1591 = vmatpush1.msra.mxu0 0.0
    %1592 = vmatprep.subr.mxu0 0.0
    %1593 = vmatpush1.msra.mxu0 0.0
    %1594 = vmatprep.subr.mxu0 0.0
    %1595 = vmatpush1.msra.mxu0 0.0
    %1596 = vmatprep.subr.mxu0 0.0
    %1597 = vmatpush1.msra.mxu0 0.0
    %1598 = vmatprep.subr.mxu0 0.0
    %1599 = vmatpush1.msra.mxu0 0.0
    %1600 = vmatprep.subr.mxu0 0.0
    %1601 = vmatpush1.msra.mxu0 0.0
    %1602 = vmatprep.subr.mxu0 0.0
    %1603 = vmatpush1.msra.mxu0 0.0
    %1604 = vmatprep.subr.mxu0 0.0
    %1605 = vmatpush1.msra.mxu0 0.0
    %1606 = vmatprep.subr.mxu0 0.0
    %1607 = vmatpush1.msra.mxu0 0.0
    %1608 = vmatprep.subr.mxu0 0.0
    %1609 = vmatpush1.msra.mxu0 0.0
    %1610 = vmatprep.subr.mxu0 0.0
    %1611 = vmatpush1.msra.mxu0 0.0
    %1612 = vmatprep.subr.mxu0 0.0
    %1613 = vmatpush1.msra.mxu0 0.0
    %1614 = vmatprep.subr.mxu0 0.0
    %1615 = vmatpush1.msra.mxu0 0.0
    %1616 = vmatprep.subr.mxu0 0.0
    %1617 = vmatpush1.msra.mxu0 0.0
    %1618 = vmatprep.subr.mxu0 0.0
    %1619 = vmatpush1.msra.mxu0 0.0
    %1620 = vmatprep.subr.mxu0 0.0
    %1621 = vmatpush1.msra.mxu0 0.0
    %1622 = vmatprep.subr.mxu0 0.0
    %1623 = vmatpush1.msra.mxu0 0.0
    %1624 = vmatprep.subr.mxu0 0.0
    %1625 = vmatpush1.msra.mxu0 0.0
    %1626 = vmatprep.subr.mxu0 0.0
    %1627 = vmatpush1.msra.mxu0 0.0
    %1628 = vmatprep.subr.mxu0 0.0
    %1629 = vmatpush1.msra.mxu0 0.0
    %1630 = vmatprep.subr.mxu0 0.0
    %1631 = vmatpush1.msra.mxu0 0.0
    %1632 = vmatprep.mubr.f32.mxu0 0.0
    %1633 = vmatmul.mubr.f32.gmra.mrb[0].mxu0 %v1566
    %v1634 = vpop.f32.mrb[0].mxu0
    %v1635 = vadd.f32 %v1563, %v1634
    %v1636 = vpop.f32.mrb[0].mxu0
    %1637 = vdwg.mxu0
    %v1638 = vmax.f32 %v1635, 0.0
    %v1639 = vlaneseq
    %v1640 = vshrl.u32 %v1639, 7
    %v1641 = vsub.s32 4, %v1640
    %v1642 = vrot.slane %v72, %v1641
    %v1643 = vmul.f32 %v1638, %v1642
    %vm1644 = vcmask 254976
    %v1645 = vsel %vm1644, %v1643, 0.0
    %1646 = vadd.xlane.f32.xlu0 %v1645
    %v1647 = vpop.xlane.xlu0 %1646
    %v1648 = vlaneseq
    %v1649 = vshrl.u32 %v1648, 7
    %v1650 = vsub.s32 5, %v1649
    %v1651 = vrot.slane %v72, %v1650
    %v1652 = vadd.f32 %v1647, %v1651
    %vm1653 = vcmask 1024
    %1654 = vst.msk [vmem:[%s5] sm:$0x3] %vm1653, %v1652
    // Predicated region
    $region30: #{critic_forward.1} parent=1 // pred_check
      _
    $region31: #{critic_forward.1} parent=1 // pred_check_branch
      %1656 = sbr.rel (0) target = $region33
    $region32: #{critic_forward.1} parent=1 // pred_region
      _
    $region33: #{critic_forward.1} parent=1 // pred_fallthru
      _
    // Predicated region
    $region34: #{critic_forward.1} parent=1 // pred_check
      _
    $region35: #{critic_forward.1} parent=1 // pred_check_branch
      %1658 = sbr.rel (0) target = $region37
    $region36: #{critic_forward.1} parent=1 // pred_region
      _
    $region37: #{critic_forward.1} parent=1 // pred_fallthru
      _
    %1659 = vsyncpa [#allocation3], 1
    %1660 = vsyncpa [#allocation5], 1

</llo_original>
